<compile_context>
chip_gen: v7x
topology: tpu7x:2x2x1
jax: 0.10.0
libtpu: 0.0.40
codegen_flags: <defaults>
</compile_context>

<pallas_src>
import functools

import jax
import jax.numpy as jnp
from jax.experimental import pallas as pl
from jax.experimental.pallas import tpu as pltpu


def gcn_layers_kernel(a_ref, x_ref, w1_ref, w2_ref, w3_ref, o_ref):
    """Three fused GCN layers for a tile of `Bt` batch elements.

    a_ref: (Bt, N, N)   x_ref: (Bt, N, F)
    w1:    (F, F)       w2:    (F, F//2)     w3: (F//2, dim_out)
    o_ref: (Bt, N, dim_out)  (float32)
    """
    Bt, N, _ = x_ref.shape
    cdt = x_ref.dtype            # MXU operand dtype (f32, or bf16 on v6e/v7x)
    A = a_ref[...]               # loaded once, reused by all three layers

    def layer(h, w_ref):
        # Per-sample graph aggregation: A[b] @ h[b]  (batched MXU matmul).
        g = jnp.einsum('bij,bjf->bif', A, h.astype(cdt),
                       preferred_element_type=jnp.float32)
        # Fuse the weight matmul over all Bt*N rows -> one large-M MXU call.
        # (Bt, N, F') <-> (Bt*N, F') are free leading-dim reshapes (N % 8 == 0).
        g2 = g.reshape(Bt * N, g.shape[-1]).astype(cdt)
        z = jnp.dot(g2, w_ref[...], preferred_element_type=jnp.float32)
        return jnp.maximum(z, 0.0).reshape(Bt, N, z.shape[-1])   # f32

    h = layer(x_ref[...], w1_ref)
    h = layer(h, w2_ref)
    h = layer(h, w3_ref)
    o_ref[...] = h


def gcn_forward(A, X, w1, w2, w3, wo, bo, *, block_b=8,
                compute_dtype=jnp.float32):
    """Full GCN forward. Pallas kernel runs the three graph-conv layers;
    the final Linear + l2norm is a standard dense GEMM left to XLA."""
    batch, N, F = X.shape
    dim_out = w3.shape[1]
    assert A.shape == (batch, N, N)
    assert wo.shape[0] == N * dim_out, "module requires objects == dim_in"

    # Pad batch up to a multiple of the batch tile.
    pad = (-batch) % block_b
    if pad:
        A = jnp.concatenate([A, jnp.zeros((pad, N, N), A.dtype)], axis=0)
        X = jnp.concatenate([X, jnp.zeros((pad, N, F), X.dtype)], axis=0)
    bpad = batch + pad

    cdt = compute_dtype
    Ac, Xc = A.astype(cdt), X.astype(cdt)
    w1c, w2c, w3c = w1.astype(cdt), w2.astype(cdt), w3.astype(cdt)

    h = pl.pallas_call(
        gcn_layers_kernel,
        out_shape=jax.ShapeDtypeStruct((bpad, N, dim_out), jnp.float32),
        grid_spec=pltpu.PrefetchScalarGridSpec(
            num_scalar_prefetch=0,
            grid=(bpad // block_b,),
            in_specs=[
                pl.BlockSpec((block_b, N, N), lambda b: (b, 0, 0)),   # A tile
                pl.BlockSpec((block_b, N, F), lambda b: (b, 0, 0)),   # X tile
                pl.BlockSpec(w1c.shape, lambda b: (0, 0)),            # W1 (resident)
                pl.BlockSpec(w2c.shape, lambda b: (0, 0)),            # W2 (resident)
                pl.BlockSpec(w3c.shape, lambda b: (0, 0)),            # W3 (resident)
            ],
            out_specs=pl.BlockSpec((block_b, N, dim_out), lambda b: (b, 0, 0)),
        ),
        compiler_params=pltpu.CompilerParams(
            # Batch-tile axis is parallel -> splits across v7x's two TCs.
            dimension_semantics=("parallel",),
            # Explicit VMEM budget; safe on v5e/v6e and within v7x's 64 MiB.
            vmem_limit_bytes=32 * 1024 * 1024,
        ),
    )(Ac, Xc, w1c, w2c, w3c)

    h = h[:batch]                                   # drop batch padding
    # Final Linear + l2norm (exact torch semantics: x / (sqrt(sum x^2) + eps)).
    y = h.reshape(batch, N * dim_out) @ wo + bo
    norm = jnp.sqrt(jnp.sum(y * y, axis=-1, keepdims=True)) + 1e-8
    return y / norm


def init_params(key, dim_in, dim_out, dim_embed):
    # PyTorch Linear stores (out, in); build the transposed (in, out) directly.
    k1, k2, k3, k4, k5 = jax.random.split(key, 5)
    w1 = jax.random.normal(k1, (dim_in, dim_in), jnp.float32) * 0.1
    w2 = jax.random.normal(k2, (dim_in, dim_in // 2), jnp.float32) * 0.1
    w3 = jax.random.normal(k3, (dim_in // 2, dim_out), jnp.float32) * 0.1
    wo = jax.random.normal(k4, (dim_out * dim_in, dim_embed), jnp.float32) * 0.1
    bo = jax.random.normal(k5, (dim_embed,), jnp.float32) * 0.1
    return w1, w2, w3, wo, bo


def ref_forward(A, X, w1, w2, w3, wo, bo):
    # Pure-JAX reference reproducing the PyTorch forward exactly.
    batch = X.shape[0]
    h = jnp.maximum(jnp.einsum('bij,bjf->bif', A, X) @ w1, 0.0)
    h = jnp.maximum(jnp.einsum('bij,bjf->bif', A, h) @ w2, 0.0)
    h = jnp.maximum(jnp.einsum('bij,bjf->bif', A, h) @ w3, 0.0)
    y = h.reshape(batch, -1) @ wo + bo
    norm = jnp.sqrt(jnp.sum(y * y, axis=-1, keepdims=True)) + 1e-8
    return y / norm


if __name__ == "__main__":
    # Small shapes consistent with the module: objects must equal dim_in.
    # dim_embed = 128 keeps the final output lane-dense.
    batch, dim_in, dim_out, dim_embed = 16, 8, 8, 128
    n_objects = dim_in

    key = jax.random.PRNGKey(0)
    ka, kx, kp = jax.random.split(key, 3)
    A = jax.random.normal(ka, (batch, n_objects, n_objects), jnp.float32)
    X = jax.random.normal(kx, (batch, n_objects, dim_in), jnp.float32)
    w1, w2, w3, wo, bo = init_params(kp, dim_in, dim_out, dim_embed)

    # For v6e/v7x throughput, pass compute_dtype=jnp.bfloat16 (f32 accumulation
    # is preserved inside the kernel). Demo stays f32 for an exact check.
    fwd = jax.jit(functools.partial(gcn_forward, block_b=8,
                                    compute_dtype=jnp.float32))
    out = jax.block_until_ready(fwd(A, X, w1, w2, w3, wo, bo))

    ref = ref_forward(A, X, w1, w2, w3, wo, bo)
    assert out.shape == (batch, dim_embed)
    assert jnp.allclose(out, ref, atol=1e-5, rtol=1e-5), "mismatch vs JAX reference"

    print("KERNEL_OK")
</pallas_src>

<mosaic_0001>
module attributes {stable_mosaic.version = 11 : i64} {
  func.func @gcn_layers_kernel(%arg0: i32, %arg1: memref<8x8x8xf32, #tpu.memory_space<vmem>>, %arg2: memref<8x8x8xf32, #tpu.memory_space<vmem>>, %arg3: memref<8x8xf32, #tpu.memory_space<vmem>>, %arg4: memref<8x4xf32, #tpu.memory_space<vmem>>, %arg5: memref<4x8xf32, #tpu.memory_space<vmem>>, %arg6: memref<8x8x8xf32, #tpu.memory_space<vmem>>) attributes {dimension_semantics = [#tpu.dimension_semantics<parallel>], iteration_bounds = array<i64: 2>, scalar_prefetch = 0 : i64, scratch_operands = 0 : i64, tpu.core_type = #tpu.core_type<tc>, window_params = [{transform_indices = @transform_0, window_bounds = array<i64: 8, 8, 8>}, {transform_indices = @transform_1, window_bounds = array<i64: 8, 8, 8>}, {pipeline_mode = #tpu.pipeline_mode<synchronous>, transform_indices = @transform_2, window_bounds = array<i64: 8, 8>}, {pipeline_mode = #tpu.pipeline_mode<synchronous>, transform_indices = @transform_3, window_bounds = array<i64: 8, 4>}, {pipeline_mode = #tpu.pipeline_mode<synchronous>, transform_indices = @transform_4, window_bounds = array<i64: 4, 8>}, {transform_indices = @transform_5, window_bounds = array<i64: 8, 8, 8>}]} {
    %c0 = arith.constant 0 : index
    %c0_0 = arith.constant 0 : index
    %c0_1 = arith.constant 0 : index
    %0 = vector.load %arg1[%c0, %c0_0, %c0_1] : memref<8x8x8xf32, #tpu.memory_space<vmem>>, vector<8x8x8xf32>
    %c0_2 = arith.constant 0 : index
    %c0_3 = arith.constant 0 : index
    %c0_4 = arith.constant 0 : index
    %1 = vector.load %arg2[%c0_2, %c0_3, %c0_4] : memref<8x8x8xf32, #tpu.memory_space<vmem>>, vector<8x8x8xf32>
    "tpu.trace_start"() <{level = 10 : i32, message = "bij,bjf->bif"}> : () -> ()
    %cst = arith.constant dense<0.000000e+00> : vector<8x8x8xf32>
    %2 = tpu.matmul %0, %1, %cst {dimension_numbers = #tpu.dot_dimension_numbers<[2], [1], [1], [2], [0, 0, 0, 1, 1, 2], [0], [0]>} : vector<8x8x8xf32>, vector<8x8x8xf32>, vector<8x8x8xf32> -> vector<8x8x8xf32>
    "tpu.trace_stop"() : () -> ()
    %3 = vector.shape_cast %2 : vector<8x8x8xf32> to vector<64x8xf32>
    %c0_5 = arith.constant 0 : index
    %c0_6 = arith.constant 0 : index
    %4 = vector.load %arg3[%c0_5, %c0_6] : memref<8x8xf32, #tpu.memory_space<vmem>>, vector<8x8xf32>
    %cst_7 = arith.constant dense<0.000000e+00> : vector<64x8xf32>
    %5 = tpu.matmul %3, %4, %cst_7 {dimension_numbers = #tpu.dot_dimension_numbers<[1], [0], [0], [1], [0, 0, 1, 1], [], []>} : vector<64x8xf32>, vector<8x8xf32>, vector<64x8xf32> -> vector<64x8xf32>
    %cst_8 = arith.constant 0.000000e+00 : f32
    %6 = vector.broadcast %cst_8 : f32 to vector<64x8xf32>
    %7 = arith.maximumf %5, %6 : vector<64x8xf32>
    %8 = vector.shape_cast %7 : vector<64x8xf32> to vector<8x8x8xf32>
    "tpu.trace_start"() <{level = 10 : i32, message = "bij,bjf->bif"}> : () -> ()
    %cst_9 = arith.constant dense<0.000000e+00> : vector<8x8x8xf32>
    %9 = tpu.matmul %0, %8, %cst_9 {dimension_numbers = #tpu.dot_dimension_numbers<[2], [1], [1], [2], [0, 0, 0, 1, 1, 2], [0], [0]>} : vector<8x8x8xf32>, vector<8x8x8xf32>, vector<8x8x8xf32> -> vector<8x8x8xf32>
    "tpu.trace_stop"() : () -> ()
    %10 = vector.shape_cast %9 : vector<8x8x8xf32> to vector<64x8xf32>
    %c0_10 = arith.constant 0 : index
    %c0_11 = arith.constant 0 : index
    %11 = vector.load %arg4[%c0_10, %c0_11] : memref<8x4xf32, #tpu.memory_space<vmem>>, vector<8x4xf32>
    %cst_12 = arith.constant dense<0.000000e+00> : vector<64x4xf32>
    %12 = tpu.matmul %10, %11, %cst_12 {dimension_numbers = #tpu.dot_dimension_numbers<[1], [0], [0], [1], [0, 0, 1, 1], [], []>} : vector<64x8xf32>, vector<8x4xf32>, vector<64x4xf32> -> vector<64x4xf32>
    %cst_13 = arith.constant 0.000000e+00 : f32
    %13 = vector.broadcast %cst_13 : f32 to vector<64x4xf32>
    %14 = arith.maximumf %12, %13 : vector<64x4xf32>
    %15 = vector.shape_cast %14 : vector<64x4xf32> to vector<8x8x4xf32>
    "tpu.trace_start"() <{level = 10 : i32, message = "bij,bjf->bif"}> : () -> ()
    %cst_14 = arith.constant dense<0.000000e+00> : vector<8x8x4xf32>
    %16 = tpu.matmul %0, %15, %cst_14 {dimension_numbers = #tpu.dot_dimension_numbers<[2], [1], [1], [2], [0, 0, 0, 1, 1, 2], [0], [0]>} : vector<8x8x8xf32>, vector<8x8x4xf32>, vector<8x8x4xf32> -> vector<8x8x4xf32>
    "tpu.trace_stop"() : () -> ()
    %17 = vector.shape_cast %16 : vector<8x8x4xf32> to vector<64x4xf32>
    %c0_15 = arith.constant 0 : index
    %c0_16 = arith.constant 0 : index
    %18 = vector.load %arg5[%c0_15, %c0_16] : memref<4x8xf32, #tpu.memory_space<vmem>>, vector<4x8xf32>
    %cst_17 = arith.constant dense<0.000000e+00> : vector<64x8xf32>
    %19 = tpu.matmul %17, %18, %cst_17 {dimension_numbers = #tpu.dot_dimension_numbers<[1], [0], [0], [1], [0, 0, 1, 1], [], []>} : vector<64x4xf32>, vector<4x8xf32>, vector<64x8xf32> -> vector<64x8xf32>
    %cst_18 = arith.constant 0.000000e+00 : f32
    %20 = vector.broadcast %cst_18 : f32 to vector<64x8xf32>
    %21 = arith.maximumf %19, %20 : vector<64x8xf32>
    %22 = vector.shape_cast %21 : vector<64x8xf32> to vector<8x8x8xf32>
    %c0_19 = arith.constant 0 : index
    %c0_20 = arith.constant 0 : index
    %c0_21 = arith.constant 0 : index
    %23 = vector.load %arg6[%c0_19, %c0_20, %c0_21] : memref<8x8x8xf32, #tpu.memory_space<vmem>>, vector<8x8x8xf32>
    tpu.vector_store %arg6[%c0_19, %c0_20, %c0_21], %22 {strides = array<i32>} : memref<8x8x8xf32, #tpu.memory_space<vmem>>, vector<8x8x8xf32>,
    return
  }
  func.func @transform_0(%arg0: i32) -> (i32, i32, i32) {
    %c0_i32 = arith.constant 0 : i32
    %c0_i32_0 = arith.constant 0 : i32
    %c0_i32_1 = arith.constant 0 : i32
    return %arg0, %c0_i32, %c0_i32_0 : i32, i32, i32
  }
  func.func @transform_1(%arg0: i32) -> (i32, i32, i32) {
    %c0_i32 = arith.constant 0 : i32
    %c0_i32_0 = arith.constant 0 : i32
    %c0_i32_1 = arith.constant 0 : i32
    return %arg0, %c0_i32, %c0_i32_0 : i32, i32, i32
  }
  func.func @transform_2(%arg0: i32) -> (i32, i32) {
    %c0_i32 = arith.constant 0 : i32
    %c0_i32_0 = arith.constant 0 : i32
    %c0_i32_1 = arith.constant 0 : i32
    return %c0_i32, %c0_i32_0 : i32, i32
  }
  func.func @transform_3(%arg0: i32) -> (i32, i32) {
    %c0_i32 = arith.constant 0 : i32
    %c0_i32_0 = arith.constant 0 : i32
    %c0_i32_1 = arith.constant 0 : i32
    return %c0_i32, %c0_i32_0 : i32, i32
  }
  func.func @transform_4(%arg0: i32) -> (i32, i32) {
    %c0_i32 = arith.constant 0 : i32
    %c0_i32_0 = arith.constant 0 : i32
    %c0_i32_1 = arith.constant 0 : i32
    return %c0_i32, %c0_i32_0 : i32, i32
  }
  func.func @transform_5(%arg0: i32) -> (i32, i32, i32) {
    %c0_i32 = arith.constant 0 : i32
    %c0_i32_0 = arith.constant 0 : i32
    %c0_i32_1 = arith.constant 0 : i32
    return %arg0, %c0_i32, %c0_i32_0 : i32, i32, i32
  }
}

</mosaic_0001>

<llo_original>
// kernel: gcn_forward.1
$region0: #{gcn_forward.1}
  #allocation0 [shape = 'u32[]', space=smem, size = 0x4, offset = 0x4, fixed_abs, tag = 'smem constant byte address 0x4 - core index']
  #allocation1 [shape = 'u32[144,128]{1,0:T(1,128)}', space=vmem, size = 0x12000, scoped, tag = 'internal scratch']
  %s0 = inlined_call_operand.vmem [shape: f32[16,8,8], index: 0, kind: input, shape index: {}]
  %s1 = inlined_call_operand.vmem [shape: f32[16,8,8], index: 1, kind: input, shape index: {}]
  %s2 = inlined_call_operand.vmem [shape: f32[8,8], index: 2, kind: input, shape index: {}]
  %s3 = inlined_call_operand.vmem [shape: f32[8,4], index: 3, kind: input, shape index: {}]
  %s4 = inlined_call_operand.vmem [shape: f32[4,8], index: 4, kind: input, shape index: {}]
  %s5 = inlined_call_operand.vmem [shape: f32[16,8,8], index: 5, kind: output, shape index: {}]
  %s6 = sld [smem:[#allocation0]]
  $region53: #{gcn_forward.1} parent=0
    _
  %s8 = ssub.s32 1, %s6
  %s9 = scalar_select 0, %s8, %s6
  loop: start=0, step=1, limit=4
  $region2: #{gcn_forward.1} parent=0 // loop_pre_header
    _
  $region3: #{gcn_forward.1} parent=0 // loop_header
    %s11 = sphi 0, %s15
    %p12 = scmp.ge.s32.totalorder %s11, 4
    %s21 = sphi 0, %s23
    %s24 = sphi 0, %s21
    %s25 = sphi 0, %s24
    %s41 = sphi 0, %s25
    %s47 = sphi 0, %s49
    %s50 = sphi 0, %s47
    %s51 = sphi 0, %s50
    %s67 = sphi 0, %s51
    %s71 = sphi 0, %s71
    %s73 = sphi 0, %s71
    %s74 = sphi 0, %s73
    %s88 = sphi 0, %s74
    %s92 = sphi 0, %s92
    %s94 = sphi 0, %s92
    %s95 = sphi 0, %s94
    %s109 = sphi 0, %s95
    %s113 = sphi 0, %s113
    %s115 = sphi 0, %s113
    %s116 = sphi 0, %s115
    %s130 = sphi 0, %s116
    %s136 = sphi 0, %s138
    %s139 = sphi 0, %s136
    %s140 = sphi 0, %s139
    %s156 = sphi 0, %s140
  $region4: #{gcn_forward.1} parent=0 // loop_header_branch
    %14 = sbr.rel (%p12) target = $region8
  $region5: #{gcn_forward.1} parent=0 // loop_body
    %s16 = ssub.s32 %s11, 1
    %s17 = ssub.s32 %s11, 2
    %s18 = sadd.s32 %s11, 1
    %s19 = ssub.s32 %s11, %s18
    %p20 = scmp.eq.s32.totalorder %s19, 0
    %s22 = sadd.s32 %s21, 1
    %s23 = scalar_select %p20, %s21, %s22
    %p26 = pneg %p20
    %p27 = scmp.eq.s32.totalorder %s11, 1
    %p28 = por %p26, %p27
    %p29 = scmp.ne.s32.totalorder %s21, %s24
    %p30 = scmp.eq.s32.totalorder %s11, 0
    %p31 = por %p29, %p30
    %p32 = scmp.ne.s32.totalorder %s21, %s24
    %p33 = scmp.eq.s32.totalorder %s16, 1
    %p34 = por %p32, %p33
    %p35 = scmp.ne.s32.totalorder %s24, %s25
    %p36 = scmp.eq.s32.totalorder %s16, 0
    %p37 = por %p35, %p36
    %p38 = scmp.ne.s32.totalorder %s24, %s25
    %p39 = scmp.eq.s32.totalorder %s17, 1
    %p40 = por %p38, %p39
    %p42 = scmp.ne.s32.totalorder %s25, %s41
    %p43 = scmp.eq.s32.totalorder %s17, 0
    %p44 = por %p42, %p43
    %s45 = ssub.s32 %s11, %s18
    %p46 = scmp.eq.s32.totalorder %s45, 0
    %s48 = sadd.s32 %s47, 1
    %s49 = scalar_select %p46, %s47, %s48
    %p52 = pneg %p46
    %p53 = scmp.eq.s32.totalorder %s11, 1
    %p54 = por %p52, %p53
    %p55 = scmp.ne.s32.totalorder %s47, %s50
    %p56 = scmp.eq.s32.totalorder %s11, 0
    %p57 = por %p55, %p56
    %p58 = scmp.ne.s32.totalorder %s47, %s50
    %p59 = scmp.eq.s32.totalorder %s16, 1
    %p60 = por %p58, %p59
    %p61 = scmp.ne.s32.totalorder %s50, %s51
    %p62 = scmp.eq.s32.totalorder %s16, 0
    %p63 = por %p61, %p62
    %p64 = scmp.ne.s32.totalorder %s50, %s51
    %p65 = scmp.eq.s32.totalorder %s17, 1
    %p66 = por %p64, %p65
    %p68 = scmp.ne.s32.totalorder %s51, %s67
    %p69 = scmp.eq.s32.totalorder %s17, 0
    %p70 = por %p68, %p69
    %s72 = sadd.s32 %s71, 1
    %p75 = scmp.eq.s32.totalorder %s11, 1
    %p76 = scmp.ne.s32.totalorder %s71, %s73
    %p77 = scmp.eq.s32.totalorder %s11, 0
    %p78 = por %p76, %p77
    %p79 = scmp.ne.s32.totalorder %s71, %s73
    %p80 = scmp.eq.s32.totalorder %s16, 1
    %p81 = por %p79, %p80
    %p82 = scmp.ne.s32.totalorder %s73, %s74
    %p83 = scmp.eq.s32.totalorder %s16, 0
    %p84 = por %p82, %p83
    %p85 = scmp.ne.s32.totalorder %s73, %s74
    %p86 = scmp.eq.s32.totalorder %s17, 1
    %p87 = por %p85, %p86
    %p89 = scmp.ne.s32.totalorder %s74, %s88
    %p90 = scmp.eq.s32.totalorder %s17, 0
    %p91 = por %p89, %p90
    %s93 = sadd.s32 %s92, 1
    %p96 = scmp.eq.s32.totalorder %s11, 1
    %p97 = scmp.ne.s32.totalorder %s92, %s94
    %p98 = scmp.eq.s32.totalorder %s11, 0
    %p99 = por %p97, %p98
    %p100 = scmp.ne.s32.totalorder %s92, %s94
    %p101 = scmp.eq.s32.totalorder %s16, 1
    %p102 = por %p100, %p101
    %p103 = scmp.ne.s32.totalorder %s94, %s95
    %p104 = scmp.eq.s32.totalorder %s16, 0
    %p105 = por %p103, %p104
    %p106 = scmp.ne.s32.totalorder %s94, %s95
    %p107 = scmp.eq.s32.totalorder %s17, 1
    %p108 = por %p106, %p107
    %p110 = scmp.ne.s32.totalorder %s95, %s109
    %p111 = scmp.eq.s32.totalorder %s17, 0
    %p112 = por %p110, %p111
    %s114 = sadd.s32 %s113, 1
    %p117 = scmp.eq.s32.totalorder %s11, 1
    %p118 = scmp.ne.s32.totalorder %s113, %s115
    %p119 = scmp.eq.s32.totalorder %s11, 0
    %p120 = por %p118, %p119
    %p121 = scmp.ne.s32.totalorder %s113, %s115
    %p122 = scmp.eq.s32.totalorder %s16, 1
    %p123 = por %p121, %p122
    %p124 = scmp.ne.s32.totalorder %s115, %s116
    %p125 = scmp.eq.s32.totalorder %s16, 0
    %p126 = por %p124, %p125
    %p127 = scmp.ne.s32.totalorder %s115, %s116
    %p128 = scmp.eq.s32.totalorder %s17, 1
    %p129 = por %p127, %p128
    %p131 = scmp.ne.s32.totalorder %s116, %s130
    %p132 = scmp.eq.s32.totalorder %s17, 0
    %p133 = por %p131, %p132
    %s134 = ssub.s32 %s11, %s18
    %p135 = scmp.eq.s32.totalorder %s134, 0
    %s137 = sadd.s32 %s136, 1
    %s138 = scalar_select %p135, %s136, %s137
    %p141 = pneg %p135
    %p142 = scmp.eq.s32.totalorder %s11, 1
    %p143 = por %p141, %p142
    %p144 = scmp.ne.s32.totalorder %s136, %s139
    %p145 = scmp.eq.s32.totalorder %s11, 0
    %p146 = por %p144, %p145
    %p147 = scmp.ne.s32.totalorder %s136, %s139
    %p148 = scmp.eq.s32.totalorder %s16, 1
    %p149 = por %p147, %p148
    %p150 = scmp.ne.s32.totalorder %s139, %s140
    %p151 = scmp.eq.s32.totalorder %s16, 0
    %p152 = por %p150, %p151
    %p153 = scmp.ne.s32.totalorder %s139, %s140
    %p154 = scmp.eq.s32.totalorder %s17, 1
    %p155 = por %p153, %p154
    %p157 = scmp.ne.s32.totalorder %s140, %s156
    %p158 = scmp.eq.s32.totalorder %s17, 0
    %p159 = por %p157, %p158
    %p160 = scmp.le.s32.totalorder 1, %s11
    %p161 = scmp.lt.s32.totalorder %s11, 3
    %p162 = pnand %p160, %p161
    %p163 = pneg %p162
    // Predicated region
    $region9: #{gcn_forward.1} parent=5 // pred_check
      _
    $region10: #{gcn_forward.1} parent=5 // pred_check_branch
      %165 = sbr.rel (%p162) target = $region12
    $region11: #{gcn_forward.1} parent=5 // pred_region
      %s166 = ssub.s32 %s11, 1
      // Predicated region
      $region13: #{gcn_forward.1} parent=11 // pred_check
        %p167 = pneg %p84
      $region14: #{gcn_forward.1} parent=11 // pred_check_branch
        %169 = sbr.rel (%p167) target = $region16
      $region15: #{gcn_forward.1} parent=11 // pred_region
        _
      $region16: #{gcn_forward.1} parent=11 // pred_fallthru
        _
      // Predicated region
      $region17: #{gcn_forward.1} parent=11 // pred_check
        %p170 = pneg %p105
      $region18: #{gcn_forward.1} parent=11 // pred_check_branch
        %172 = sbr.rel (%p170) target = $region20
      $region19: #{gcn_forward.1} parent=11 // pred_region
        _
      $region20: #{gcn_forward.1} parent=11 // pred_fallthru
        _
      // Predicated region
      $region21: #{gcn_forward.1} parent=11 // pred_check
        %p173 = pneg %p126
      $region22: #{gcn_forward.1} parent=11 // pred_check_branch
        %175 = sbr.rel (%p173) target = $region24
      $region23: #{gcn_forward.1} parent=11 // pred_region
        _
      $region24: #{gcn_forward.1} parent=11 // pred_fallthru
        _
    $region12: #{gcn_forward.1} parent=5 // pred_fallthru
      _
    %p176 = scmp.lt.s32.totalorder %s11, 2
    // Predicated region
    $region25: #{gcn_forward.1} parent=5 // pred_check
      %p177 = pneg %p176
    $region26: #{gcn_forward.1} parent=5 // pred_check_branch
      %179 = sbr.rel (%p177) target = $region28
    $region27: #{gcn_forward.1} parent=5 // pred_region
      // Predicated region
      $region29: #{gcn_forward.1} parent=27 // pred_check
        %p180 = pneg %p31
      $region30: #{gcn_forward.1} parent=27 // pred_check_branch
        %182 = sbr.rel (%p180) target = $region32
      $region31: #{gcn_forward.1} parent=27 // pred_region
        %s183 = smul.u32 8, %s11
        %p184 = scmp.lt.s32.totalorder %s183, 15
        %s185 = scalar_select %p184, %s183, 15
        %s186 = smul.addr %s185, 8
        %s187 = scalar_lea.vmem %s0, %s186
        %s188 = smul.u32 8, %s11
      $region32: #{gcn_forward.1} parent=27 // pred_fallthru
        _
      // Predicated region
      $region33: #{gcn_forward.1} parent=27 // pred_check
        %p189 = pneg %p57
      $region34: #{gcn_forward.1} parent=27 // pred_check_branch
        %191 = sbr.rel (%p189) target = $region36
      $region35: #{gcn_forward.1} parent=27 // pred_region
        %s192 = smul.u32 8, %s11
        %p193 = scmp.lt.s32.totalorder %s192, 15
        %s194 = scalar_select %p193, %s192, 15
        %s195 = smul.addr %s194, 8
        %s196 = scalar_lea.vmem %s1, %s195
        %s197 = smul.u32 8, %s11
      $region36: #{gcn_forward.1} parent=27 // pred_fallthru
        _
    $region28: #{gcn_forward.1} parent=5 // pred_fallthru
      _
    %p198 = scmp.le.s32.totalorder 1, %s11
    %p199 = scmp.lt.s32.totalorder %s11, 3
    %p200 = pnand %p198, %p199
    %p201 = pneg %p200
    // Predicated region
    $region37: #{gcn_forward.1} parent=5 // pred_check
      _
    $region38: #{gcn_forward.1} parent=5 // pred_check_branch
      %203 = sbr.rel (%p200) target = $region40
    $region39: #{gcn_forward.1} parent=5 // pred_region
      %s204 = ssub.s32 %s11, 1
      %s205 = smul.u32 8, %s16
      %p206 = scmp.lt.s32.totalorder %s205, 15
      %s207 = scalar_select %p206, %s205, 15
      %s208 = smul.addr %s207, 8
      %s209 = scalar_lea.vmem %s0, %s208
      %p210 = pneg %p37
      %p211 = pneg %p34
      %s212 = smul.u32 8, %s16
      %p213 = scmp.lt.s32.totalorder %s212, 15
      %s214 = scalar_select %p213, %s212, 15
      %s215 = smul.addr %s214, 8
      %s216 = scalar_lea.vmem %s1, %s215
      %p217 = pneg %p63
      %p218 = pneg %p60
      %p219 = pneg %p84
      %p220 = pneg %p81
      %p221 = pneg %p105
      %p222 = pneg %p102
      %p223 = pneg %p126
      %p224 = pneg %p123
      %p225 = pneg %p152
      %p226 = pneg %p149
      %s227 = smul.u32 8, %s16
      %p228 = scmp.lt.s32.totalorder %s227, 15
      %s229 = scalar_select %p228, %s227, 15
      %s230 = smul.addr %s229, 8
      %s231 = scalar_lea.vmem %s5, %s230
      %s232 = smul.u32 8, %s16
      %p233 = scmp.lt.s32.totalorder %s232, 15
      %s234 = scalar_select %p233, %s232, 15
      %s235 = smul.addr %s234, 8
      %s236 = scalar_lea.vmem %s0, %s235
      %s237 = smul.u32 8, %s16
      %s238 = smul.u32 8, %s16
      %p239 = scmp.lt.s32.totalorder %s238, 15
      %s240 = scalar_select %p239, %s238, 15
      %s241 = smul.addr %s240, 8
      %s242 = scalar_lea.vmem %s1, %s241
      %s243 = smul.u32 8, %s16
      %s244 = smul.u32 8, %s16
      %p245 = scmp.lt.s32.totalorder %s244, 15
      %s246 = scalar_select %p245, %s244, 15
      %s247 = smul.addr %s246, 8
      %s248 = scalar_lea.vmem %s5, %s247
      %s249 = smul.u32 8, %s16
      %v250 = vld [vmem:[%s236] sm:$0xff]
      %v251 = vld [vmem:[%s236 + $0x8] sm:$0xff]
      %v252 = vld [vmem:[%s236 + $0x10] sm:$0xff]
      %v253 = vld [vmem:[%s236 + $0x18] sm:$0xff]
      %v254 = vld [vmem:[%s236 + $0x20] sm:$0xff]
      %v255 = vld [vmem:[%s236 + $0x28] sm:$0xff]
      %v256 = vld [vmem:[%s236 + $0x30] sm:$0xff]
      %v257 = vld [vmem:[%s236 + $0x38] sm:$0xff]
      %v258 = vld [vmem:[%s242] sm:$0xff]
      %v259 = vld [vmem:[%s242 + $0x8] sm:$0xff]
      %v260 = vld [vmem:[%s242 + $0x10] sm:$0xff]
      %v261 = vld [vmem:[%s242 + $0x18] sm:$0xff]
      %v262 = vld [vmem:[%s242 + $0x20] sm:$0xff]
      %v263 = vld [vmem:[%s242 + $0x28] sm:$0xff]
      %v264 = vld [vmem:[%s242 + $0x30] sm:$0xff]
      %v265 = vld [vmem:[%s242 + $0x38] sm:$0xff]
      %vm266 = vcmask 64512
      %v268 = vsel %vm266, %v250, 0
      %270 = vmatprep.subr.mxu0 0.0
      %271 = vmatpush1.msra.mxu0 %v258
      %272 = vmatprep.subr.mxu0 0.0
      %273 = vmatpush1.msra.mxu0 0.0
      %274 = vmatprep.subr.mxu0 0.0
      %275 = vmatpush1.msra.mxu0 0.0
      %276 = vmatprep.subr.mxu0 0.0
      %277 = vmatpush1.msra.mxu0 0.0
      %278 = vmatprep.subr.mxu0 0.0
      %279 = vmatpush1.msra.mxu0 0.0
      %280 = vmatprep.subr.mxu0 0.0
      %281 = vmatpush1.msra.mxu0 0.0
      %282 = vmatprep.subr.mxu0 0.0
      %283 = vmatpush1.msra.mxu0 0.0
      %284 = vmatprep.subr.mxu0 0.0
      %285 = vmatpush1.msra.mxu0 0.0
      %286 = vmatprep.subr.mxu0 0.0
      %287 = vmatpush1.msra.mxu0 0.0
      %288 = vmatprep.subr.mxu0 0.0
      %289 = vmatpush1.msra.mxu0 0.0
      %290 = vmatprep.subr.mxu0 0.0
      %291 = vmatpush1.msra.mxu0 0.0
      %292 = vmatprep.subr.mxu0 0.0
      %293 = vmatpush1.msra.mxu0 0.0
      %294 = vmatprep.subr.mxu0 0.0
      %295 = vmatpush1.msra.mxu0 0.0
      %296 = vmatprep.subr.mxu0 0.0
      %297 = vmatpush1.msra.mxu0 0.0
      %298 = vmatprep.subr.mxu0 0.0
      %299 = vmatpush1.msra.mxu0 0.0
      %300 = vmatprep.subr.mxu0 0.0
      %301 = vmatpush1.msra.mxu0 0.0
      %302 = vmatprep.subr.mxu0 0.0
      %303 = vmatpush1.msra.mxu0 0.0
      %304 = vmatprep.subr.mxu0 0.0
      %305 = vmatpush1.msra.mxu0 0.0
      %306 = vmatprep.subr.mxu0 0.0
      %307 = vmatpush1.msra.mxu0 0.0
      %308 = vmatprep.subr.mxu0 0.0
      %309 = vmatpush1.msra.mxu0 0.0
      %310 = vmatprep.subr.mxu0 0.0
      %311 = vmatpush1.msra.mxu0 0.0
      %312 = vmatprep.subr.mxu0 0.0
      %313 = vmatpush1.msra.mxu0 0.0
      %314 = vmatprep.subr.mxu0 0.0
      %315 = vmatpush1.msra.mxu0 0.0
      %316 = vmatprep.subr.mxu0 0.0
      %317 = vmatpush1.msra.mxu0 0.0
      %318 = vmatprep.subr.mxu0 0.0
      %319 = vmatpush1.msra.mxu0 0.0
      %320 = vmatprep.subr.mxu0 0.0
      %321 = vmatpush1.msra.mxu0 0.0
      %322 = vmatprep.subr.mxu0 0.0
      %323 = vmatpush1.msra.mxu0 0.0
      %324 = vmatprep.subr.mxu0 0.0
      %325 = vmatpush1.msra.mxu0 0.0
      %326 = vmatprep.subr.mxu0 0.0
      %327 = vmatpush1.msra.mxu0 0.0
      %328 = vmatprep.subr.mxu0 0.0
      %329 = vmatpush1.msra.mxu0 0.0
      %330 = vmatprep.subr.mxu0 0.0
      %331 = vmatpush1.msra.mxu0 0.0
      %332 = vmatprep.subr.mxu0 0.0
      %333 = vmatpush1.msra.mxu0 0.0
      %334 = vmatprep.mubr.f32.mxu0 0.0
      %335 = vmatmul.mubr.f32.gmra.mrb[0].mxu0 %v268
      %v336 = vpop.f32.mrb[0].mxu0
      %v337 = vadd.f32 0.0, %v336
      %v338 = vpop.f32.mrb[0].mxu0
      %339 = vdwg.mxu0
      %v341 = vsel %vm266, %v251, 0
      %343 = vmatprep.subr.mxu0 0.0
      %344 = vmatpush1.msra.mxu0 %v259
      %345 = vmatprep.subr.mxu0 0.0
      %346 = vmatpush1.msra.mxu0 0.0
      %347 = vmatprep.subr.mxu0 0.0
      %348 = vmatpush1.msra.mxu0 0.0
      %349 = vmatprep.subr.mxu0 0.0
      %350 = vmatpush1.msra.mxu0 0.0
      %351 = vmatprep.subr.mxu0 0.0
      %352 = vmatpush1.msra.mxu0 0.0
      %353 = vmatprep.subr.mxu0 0.0
      %354 = vmatpush1.msra.mxu0 0.0
      %355 = vmatprep.subr.mxu0 0.0
      %356 = vmatpush1.msra.mxu0 0.0
      %357 = vmatprep.subr.mxu0 0.0
      %358 = vmatpush1.msra.mxu0 0.0
      %359 = vmatprep.subr.mxu0 0.0
      %360 = vmatpush1.msra.mxu0 0.0
      %361 = vmatprep.subr.mxu0 0.0
      %362 = vmatpush1.msra.mxu0 0.0
      %363 = vmatprep.subr.mxu0 0.0
      %364 = vmatpush1.msra.mxu0 0.0
      %365 = vmatprep.subr.mxu0 0.0
      %366 = vmatpush1.msra.mxu0 0.0
      %367 = vmatprep.subr.mxu0 0.0
      %368 = vmatpush1.msra.mxu0 0.0
      %369 = vmatprep.subr.mxu0 0.0
      %370 = vmatpush1.msra.mxu0 0.0
      %371 = vmatprep.subr.mxu0 0.0
      %372 = vmatpush1.msra.mxu0 0.0
      %373 = vmatprep.subr.mxu0 0.0
      %374 = vmatpush1.msra.mxu0 0.0
      %375 = vmatprep.subr.mxu0 0.0
      %376 = vmatpush1.msra.mxu0 0.0
      %377 = vmatprep.subr.mxu0 0.0
      %378 = vmatpush1.msra.mxu0 0.0
      %379 = vmatprep.subr.mxu0 0.0
      %380 = vmatpush1.msra.mxu0 0.0
      %381 = vmatprep.subr.mxu0 0.0
      %382 = vmatpush1.msra.mxu0 0.0
      %383 = vmatprep.subr.mxu0 0.0
      %384 = vmatpush1.msra.mxu0 0.0
      %385 = vmatprep.subr.mxu0 0.0
      %386 = vmatpush1.msra.mxu0 0.0
      %387 = vmatprep.subr.mxu0 0.0
      %388 = vmatpush1.msra.mxu0 0.0
      %389 = vmatprep.subr.mxu0 0.0
      %390 = vmatpush1.msra.mxu0 0.0
      %391 = vmatprep.subr.mxu0 0.0
      %392 = vmatpush1.msra.mxu0 0.0
      %393 = vmatprep.subr.mxu0 0.0
      %394 = vmatpush1.msra.mxu0 0.0
      %395 = vmatprep.subr.mxu0 0.0
      %396 = vmatpush1.msra.mxu0 0.0
      %397 = vmatprep.subr.mxu0 0.0
      %398 = vmatpush1.msra.mxu0 0.0
      %399 = vmatprep.subr.mxu0 0.0
      %400 = vmatpush1.msra.mxu0 0.0
      %401 = vmatprep.subr.mxu0 0.0
      %402 = vmatpush1.msra.mxu0 0.0
      %403 = vmatprep.subr.mxu0 0.0
      %404 = vmatpush1.msra.mxu0 0.0
      %405 = vmatprep.subr.mxu0 0.0
      %406 = vmatpush1.msra.mxu0 0.0
      %407 = vmatprep.mubr.f32.mxu0 0.0
      %408 = vmatmul.mubr.f32.gmra.mrb[0].mxu0 %v341
      %v409 = vpop.f32.mrb[0].mxu0
      %v410 = vadd.f32 0.0, %v409
      %v411 = vpop.f32.mrb[0].mxu0
      %412 = vdwg.mxu0
      %v414 = vsel %vm266, %v252, 0
      %416 = vmatprep.subr.mxu0 0.0
      %417 = vmatpush1.msra.mxu0 %v260
      %418 = vmatprep.subr.mxu0 0.0
      %419 = vmatpush1.msra.mxu0 0.0
      %420 = vmatprep.subr.mxu0 0.0
      %421 = vmatpush1.msra.mxu0 0.0
      %422 = vmatprep.subr.mxu0 0.0
      %423 = vmatpush1.msra.mxu0 0.0
      %424 = vmatprep.subr.mxu0 0.0
      %425 = vmatpush1.msra.mxu0 0.0
      %426 = vmatprep.subr.mxu0 0.0
      %427 = vmatpush1.msra.mxu0 0.0
      %428 = vmatprep.subr.mxu0 0.0
      %429 = vmatpush1.msra.mxu0 0.0
      %430 = vmatprep.subr.mxu0 0.0
      %431 = vmatpush1.msra.mxu0 0.0
      %432 = vmatprep.subr.mxu0 0.0
      %433 = vmatpush1.msra.mxu0 0.0
      %434 = vmatprep.subr.mxu0 0.0
      %435 = vmatpush1.msra.mxu0 0.0
      %436 = vmatprep.subr.mxu0 0.0
      %437 = vmatpush1.msra.mxu0 0.0
      %438 = vmatprep.subr.mxu0 0.0
      %439 = vmatpush1.msra.mxu0 0.0
      %440 = vmatprep.subr.mxu0 0.0
      %441 = vmatpush1.msra.mxu0 0.0
      %442 = vmatprep.subr.mxu0 0.0
      %443 = vmatpush1.msra.mxu0 0.0
      %444 = vmatprep.subr.mxu0 0.0
      %445 = vmatpush1.msra.mxu0 0.0
      %446 = vmatprep.subr.mxu0 0.0
      %447 = vmatpush1.msra.mxu0 0.0
      %448 = vmatprep.subr.mxu0 0.0
      %449 = vmatpush1.msra.mxu0 0.0
      %450 = vmatprep.subr.mxu0 0.0
      %451 = vmatpush1.msra.mxu0 0.0
      %452 = vmatprep.subr.mxu0 0.0
      %453 = vmatpush1.msra.mxu0 0.0
      %454 = vmatprep.subr.mxu0 0.0
      %455 = vmatpush1.msra.mxu0 0.0
      %456 = vmatprep.subr.mxu0 0.0
      %457 = vmatpush1.msra.mxu0 0.0
      %458 = vmatprep.subr.mxu0 0.0
      %459 = vmatpush1.msra.mxu0 0.0
      %460 = vmatprep.subr.mxu0 0.0
      %461 = vmatpush1.msra.mxu0 0.0
      %462 = vmatprep.subr.mxu0 0.0
      %463 = vmatpush1.msra.mxu0 0.0
      %464 = vmatprep.subr.mxu0 0.0
      %465 = vmatpush1.msra.mxu0 0.0
      %466 = vmatprep.subr.mxu0 0.0
      %467 = vmatpush1.msra.mxu0 0.0
      %468 = vmatprep.subr.mxu0 0.0
      %469 = vmatpush1.msra.mxu0 0.0
      %470 = vmatprep.subr.mxu0 0.0
      %471 = vmatpush1.msra.mxu0 0.0
      %472 = vmatprep.subr.mxu0 0.0
      %473 = vmatpush1.msra.mxu0 0.0
      %474 = vmatprep.subr.mxu0 0.0
      %475 = vmatpush1.msra.mxu0 0.0
      %476 = vmatprep.subr.mxu0 0.0
      %477 = vmatpush1.msra.mxu0 0.0
      %478 = vmatprep.subr.mxu0 0.0
      %479 = vmatpush1.msra.mxu0 0.0
      %480 = vmatprep.mubr.f32.mxu0 0.0
      %481 = vmatmul.mubr.f32.gmra.mrb[0].mxu0 %v414
      %v482 = vpop.f32.mrb[0].mxu0
      %v483 = vadd.f32 0.0, %v482
      %v484 = vpop.f32.mrb[0].mxu0
      %485 = vdwg.mxu0
      %v487 = vsel %vm266, %v253, 0
      %489 = vmatprep.subr.mxu0 0.0
      %490 = vmatpush1.msra.mxu0 %v261
      %491 = vmatprep.subr.mxu0 0.0
      %492 = vmatpush1.msra.mxu0 0.0
      %493 = vmatprep.subr.mxu0 0.0
      %494 = vmatpush1.msra.mxu0 0.0
      %495 = vmatprep.subr.mxu0 0.0
      %496 = vmatpush1.msra.mxu0 0.0
      %497 = vmatprep.subr.mxu0 0.0
      %498 = vmatpush1.msra.mxu0 0.0
      %499 = vmatprep.subr.mxu0 0.0
      %500 = vmatpush1.msra.mxu0 0.0
      %501 = vmatprep.subr.mxu0 0.0
      %502 = vmatpush1.msra.mxu0 0.0
      %503 = vmatprep.subr.mxu0 0.0
      %504 = vmatpush1.msra.mxu0 0.0
      %505 = vmatprep.subr.mxu0 0.0
      %506 = vmatpush1.msra.mxu0 0.0
      %507 = vmatprep.subr.mxu0 0.0
      %508 = vmatpush1.msra.mxu0 0.0
      %509 = vmatprep.subr.mxu0 0.0
      %510 = vmatpush1.msra.mxu0 0.0
      %511 = vmatprep.subr.mxu0 0.0
      %512 = vmatpush1.msra.mxu0 0.0
      %513 = vmatprep.subr.mxu0 0.0
      %514 = vmatpush1.msra.mxu0 0.0
      %515 = vmatprep.subr.mxu0 0.0
      %516 = vmatpush1.msra.mxu0 0.0
      %517 = vmatprep.subr.mxu0 0.0
      %518 = vmatpush1.msra.mxu0 0.0
      %519 = vmatprep.subr.mxu0 0.0
      %520 = vmatpush1.msra.mxu0 0.0
      %521 = vmatprep.subr.mxu0 0.0
      %522 = vmatpush1.msra.mxu0 0.0
      %523 = vmatprep.subr.mxu0 0.0
      %524 = vmatpush1.msra.mxu0 0.0
      %525 = vmatprep.subr.mxu0 0.0
      %526 = vmatpush1.msra.mxu0 0.0
      %527 = vmatprep.subr.mxu0 0.0
      %528 = vmatpush1.msra.mxu0 0.0
      %529 = vmatprep.subr.mxu0 0.0
      %530 = vmatpush1.msra.mxu0 0.0
      %531 = vmatprep.subr.mxu0 0.0
      %532 = vmatpush1.msra.mxu0 0.0
      %533 = vmatprep.subr.mxu0 0.0
      %534 = vmatpush1.msra.mxu0 0.0
      %535 = vmatprep.subr.mxu0 0.0
      %536 = vmatpush1.msra.mxu0 0.0
      %537 = vmatprep.subr.mxu0 0.0
      %538 = vmatpush1.msra.mxu0 0.0
      %539 = vmatprep.subr.mxu0 0.0
      %540 = vmatpush1.msra.mxu0 0.0
      %541 = vmatprep.subr.mxu0 0.0
      %542 = vmatpush1.msra.mxu0 0.0
      %543 = vmatprep.subr.mxu0 0.0
      %544 = vmatpush1.msra.mxu0 0.0
      %545 = vmatprep.subr.mxu0 0.0
      %546 = vmatpush1.msra.mxu0 0.0
      %547 = vmatprep.subr.mxu0 0.0
      %548 = vmatpush1.msra.mxu0 0.0
      %549 = vmatprep.subr.mxu0 0.0
      %550 = vmatpush1.msra.mxu0 0.0
      %551 = vmatprep.subr.mxu0 0.0
      %552 = vmatpush1.msra.mxu0 0.0
      %553 = vmatprep.mubr.f32.mxu0 0.0
      %554 = vmatmul.mubr.f32.gmra.mrb[0].mxu0 %v487
      %v555 = vpop.f32.mrb[0].mxu0
      %v556 = vadd.f32 0.0, %v555
      %v557 = vpop.f32.mrb[0].mxu0
      %558 = vdwg.mxu0
      %v560 = vsel %vm266, %v254, 0
      %562 = vmatprep.subr.mxu0 0.0
      %563 = vmatpush1.msra.mxu0 %v262
      %564 = vmatprep.subr.mxu0 0.0
      %565 = vmatpush1.msra.mxu0 0.0
      %566 = vmatprep.subr.mxu0 0.0
      %567 = vmatpush1.msra.mxu0 0.0
      %568 = vmatprep.subr.mxu0 0.0
      %569 = vmatpush1.msra.mxu0 0.0
      %570 = vmatprep.subr.mxu0 0.0
      %571 = vmatpush1.msra.mxu0 0.0
      %572 = vmatprep.subr.mxu0 0.0
      %573 = vmatpush1.msra.mxu0 0.0
      %574 = vmatprep.subr.mxu0 0.0
      %575 = vmatpush1.msra.mxu0 0.0
      %576 = vmatprep.subr.mxu0 0.0
      %577 = vmatpush1.msra.mxu0 0.0
      %578 = vmatprep.subr.mxu0 0.0
      %579 = vmatpush1.msra.mxu0 0.0
      %580 = vmatprep.subr.mxu0 0.0
      %581 = vmatpush1.msra.mxu0 0.0
      %582 = vmatprep.subr.mxu0 0.0
      %583 = vmatpush1.msra.mxu0 0.0
      %584 = vmatprep.subr.mxu0 0.0
      %585 = vmatpush1.msra.mxu0 0.0
      %586 = vmatprep.subr.mxu0 0.0
      %587 = vmatpush1.msra.mxu0 0.0
      %588 = vmatprep.subr.mxu0 0.0
      %589 = vmatpush1.msra.mxu0 0.0
      %590 = vmatprep.subr.mxu0 0.0
      %591 = vmatpush1.msra.mxu0 0.0
      %592 = vmatprep.subr.mxu0 0.0
      %593 = vmatpush1.msra.mxu0 0.0
      %594 = vmatprep.subr.mxu0 0.0
      %595 = vmatpush1.msra.mxu0 0.0
      %596 = vmatprep.subr.mxu0 0.0
      %597 = vmatpush1.msra.mxu0 0.0
      %598 = vmatprep.subr.mxu0 0.0
      %599 = vmatpush1.msra.mxu0 0.0
      %600 = vmatprep.subr.mxu0 0.0
      %601 = vmatpush1.msra.mxu0 0.0
      %602 = vmatprep.subr.mxu0 0.0
      %603 = vmatpush1.msra.mxu0 0.0
      %604 = vmatprep.subr.mxu0 0.0
      %605 = vmatpush1.msra.mxu0 0.0
      %606 = vmatprep.subr.mxu0 0.0
      %607 = vmatpush1.msra.mxu0 0.0
      %608 = vmatprep.subr.mxu0 0.0
      %609 = vmatpush1.msra.mxu0 0.0
      %610 = vmatprep.subr.mxu0 0.0
      %611 = vmatpush1.msra.mxu0 0.0
      %612 = vmatprep.subr.mxu0 0.0
      %613 = vmatpush1.msra.mxu0 0.0
      %614 = vmatprep.subr.mxu0 0.0
      %615 = vmatpush1.msra.mxu0 0.0
      %616 = vmatprep.subr.mxu0 0.0
      %617 = vmatpush1.msra.mxu0 0.0
      %618 = vmatprep.subr.mxu0 0.0
      %619 = vmatpush1.msra.mxu0 0.0
      %620 = vmatprep.subr.mxu0 0.0
      %621 = vmatpush1.msra.mxu0 0.0
      %622 = vmatprep.subr.mxu0 0.0
      %623 = vmatpush1.msra.mxu0 0.0
      %624 = vmatprep.subr.mxu0 0.0
      %625 = vmatpush1.msra.mxu0 0.0
      %626 = vmatprep.mubr.f32.mxu0 0.0
      %627 = vmatmul.mubr.f32.gmra.mrb[0].mxu0 %v560
      %v628 = vpop.f32.mrb[0].mxu0
      %v629 = vadd.f32 0.0, %v628
      %v630 = vpop.f32.mrb[0].mxu0
      %631 = vdwg.mxu0
      %v633 = vsel %vm266, %v255, 0
      %635 = vmatprep.subr.mxu0 0.0
      %636 = vmatpush1.msra.mxu0 %v263
      %637 = vmatprep.subr.mxu0 0.0
      %638 = vmatpush1.msra.mxu0 0.0
      %639 = vmatprep.subr.mxu0 0.0
      %640 = vmatpush1.msra.mxu0 0.0
      %641 = vmatprep.subr.mxu0 0.0
      %642 = vmatpush1.msra.mxu0 0.0
      %643 = vmatprep.subr.mxu0 0.0
      %644 = vmatpush1.msra.mxu0 0.0
      %645 = vmatprep.subr.mxu0 0.0
      %646 = vmatpush1.msra.mxu0 0.0
      %647 = vmatprep.subr.mxu0 0.0
      %648 = vmatpush1.msra.mxu0 0.0
      %649 = vmatprep.subr.mxu0 0.0
      %650 = vmatpush1.msra.mxu0 0.0
      %651 = vmatprep.subr.mxu0 0.0
      %652 = vmatpush1.msra.mxu0 0.0
      %653 = vmatprep.subr.mxu0 0.0
      %654 = vmatpush1.msra.mxu0 0.0
      %655 = vmatprep.subr.mxu0 0.0
      %656 = vmatpush1.msra.mxu0 0.0
      %657 = vmatprep.subr.mxu0 0.0
      %658 = vmatpush1.msra.mxu0 0.0
      %659 = vmatprep.subr.mxu0 0.0
      %660 = vmatpush1.msra.mxu0 0.0
      %661 = vmatprep.subr.mxu0 0.0
      %662 = vmatpush1.msra.mxu0 0.0
      %663 = vmatprep.subr.mxu0 0.0
      %664 = vmatpush1.msra.mxu0 0.0
      %665 = vmatprep.subr.mxu0 0.0
      %666 = vmatpush1.msra.mxu0 0.0
      %667 = vmatprep.subr.mxu0 0.0
      %668 = vmatpush1.msra.mxu0 0.0
      %669 = vmatprep.subr.mxu0 0.0
      %670 = vmatpush1.msra.mxu0 0.0
      %671 = vmatprep.subr.mxu0 0.0
      %672 = vmatpush1.msra.mxu0 0.0
      %673 = vmatprep.subr.mxu0 0.0
      %674 = vmatpush1.msra.mxu0 0.0
      %675 = vmatprep.subr.mxu0 0.0
      %676 = vmatpush1.msra.mxu0 0.0
      %677 = vmatprep.subr.mxu0 0.0
      %678 = vmatpush1.msra.mxu0 0.0
      %679 = vmatprep.subr.mxu0 0.0
      %680 = vmatpush1.msra.mxu0 0.0
      %681 = vmatprep.subr.mxu0 0.0
      %682 = vmatpush1.msra.mxu0 0.0
      %683 = vmatprep.subr.mxu0 0.0
      %684 = vmatpush1.msra.mxu0 0.0
      %685 = vmatprep.subr.mxu0 0.0
      %686 = vmatpush1.msra.mxu0 0.0
      %687 = vmatprep.subr.mxu0 0.0
      %688 = vmatpush1.msra.mxu0 0.0
      %689 = vmatprep.subr.mxu0 0.0
      %690 = vmatpush1.msra.mxu0 0.0
      %691 = vmatprep.subr.mxu0 0.0
      %692 = vmatpush1.msra.mxu0 0.0
      %693 = vmatprep.subr.mxu0 0.0
      %694 = vmatpush1.msra.mxu0 0.0
      %695 = vmatprep.subr.mxu0 0.0
      %696 = vmatpush1.msra.mxu0 0.0
      %697 = vmatprep.subr.mxu0 0.0
      %698 = vmatpush1.msra.mxu0 0.0
      %699 = vmatprep.mubr.f32.mxu0 0.0
      %700 = vmatmul.mubr.f32.gmra.mrb[0].mxu0 %v633
      %v701 = vpop.f32.mrb[0].mxu0
      %v702 = vadd.f32 0.0, %v701
      %v703 = vpop.f32.mrb[0].mxu0
      %704 = vdwg.mxu0
      %v706 = vsel %vm266, %v256, 0
      %708 = vmatprep.subr.mxu0 0.0
      %709 = vmatpush1.msra.mxu0 %v264
      %710 = vmatprep.subr.mxu0 0.0
      %711 = vmatpush1.msra.mxu0 0.0
      %712 = vmatprep.subr.mxu0 0.0
      %713 = vmatpush1.msra.mxu0 0.0
      %714 = vmatprep.subr.mxu0 0.0
      %715 = vmatpush1.msra.mxu0 0.0
      %716 = vmatprep.subr.mxu0 0.0
      %717 = vmatpush1.msra.mxu0 0.0
      %718 = vmatprep.subr.mxu0 0.0
      %719 = vmatpush1.msra.mxu0 0.0
      %720 = vmatprep.subr.mxu0 0.0
      %721 = vmatpush1.msra.mxu0 0.0
      %722 = vmatprep.subr.mxu0 0.0
      %723 = vmatpush1.msra.mxu0 0.0
      %724 = vmatprep.subr.mxu0 0.0
      %725 = vmatpush1.msra.mxu0 0.0
      %726 = vmatprep.subr.mxu0 0.0
      %727 = vmatpush1.msra.mxu0 0.0
      %728 = vmatprep.subr.mxu0 0.0
      %729 = vmatpush1.msra.mxu0 0.0
      %730 = vmatprep.subr.mxu0 0.0
      %731 = vmatpush1.msra.mxu0 0.0
      %732 = vmatprep.subr.mxu0 0.0
      %733 = vmatpush1.msra.mxu0 0.0
      %734 = vmatprep.subr.mxu0 0.0
      %735 = vmatpush1.msra.mxu0 0.0
      %736 = vmatprep.subr.mxu0 0.0
      %737 = vmatpush1.msra.mxu0 0.0
      %738 = vmatprep.subr.mxu0 0.0
      %739 = vmatpush1.msra.mxu0 0.0
      %740 = vmatprep.subr.mxu0 0.0
      %741 = vmatpush1.msra.mxu0 0.0
      %742 = vmatprep.subr.mxu0 0.0
      %743 = vmatpush1.msra.mxu0 0.0
      %744 = vmatprep.subr.mxu0 0.0
      %745 = vmatpush1.msra.mxu0 0.0
      %746 = vmatprep.subr.mxu0 0.0
      %747 = vmatpush1.msra.mxu0 0.0
      %748 = vmatprep.subr.mxu0 0.0
      %749 = vmatpush1.msra.mxu0 0.0
      %750 = vmatprep.subr.mxu0 0.0
      %751 = vmatpush1.msra.mxu0 0.0
      %752 = vmatprep.subr.mxu0 0.0
      %753 = vmatpush1.msra.mxu0 0.0
      %754 = vmatprep.subr.mxu0 0.0
      %755 = vmatpush1.msra.mxu0 0.0
      %756 = vmatprep.subr.mxu0 0.0
      %757 = vmatpush1.msra.mxu0 0.0
      %758 = vmatprep.subr.mxu0 0.0
      %759 = vmatpush1.msra.mxu0 0.0
      %760 = vmatprep.subr.mxu0 0.0
      %761 = vmatpush1.msra.mxu0 0.0
      %762 = vmatprep.subr.mxu0 0.0
      %763 = vmatpush1.msra.mxu0 0.0
      %764 = vmatprep.subr.mxu0 0.0
      %765 = vmatpush1.msra.mxu0 0.0
      %766 = vmatprep.subr.mxu0 0.0
      %767 = vmatpush1.msra.mxu0 0.0
      %768 = vmatprep.subr.mxu0 0.0
      %769 = vmatpush1.msra.mxu0 0.0
      %770 = vmatprep.subr.mxu0 0.0
      %771 = vmatpush1.msra.mxu0 0.0
      %772 = vmatprep.mubr.f32.mxu0 0.0
      %773 = vmatmul.mubr.f32.gmra.mrb[0].mxu0 %v706
      %v774 = vpop.f32.mrb[0].mxu0
      %v775 = vadd.f32 0.0, %v774
      %v776 = vpop.f32.mrb[0].mxu0
      %777 = vdwg.mxu0
      %v779 = vsel %vm266, %v257, 0
      %781 = vmatprep.subr.mxu0 0.0
      %782 = vmatpush1.msra.mxu0 %v265
      %783 = vmatprep.subr.mxu0 0.0
      %784 = vmatpush1.msra.mxu0 0.0
      %785 = vmatprep.subr.mxu0 0.0
      %786 = vmatpush1.msra.mxu0 0.0
      %787 = vmatprep.subr.mxu0 0.0
      %788 = vmatpush1.msra.mxu0 0.0
      %789 = vmatprep.subr.mxu0 0.0
      %790 = vmatpush1.msra.mxu0 0.0
      %791 = vmatprep.subr.mxu0 0.0
      %792 = vmatpush1.msra.mxu0 0.0
      %793 = vmatprep.subr.mxu0 0.0
      %794 = vmatpush1.msra.mxu0 0.0
      %795 = vmatprep.subr.mxu0 0.0
      %796 = vmatpush1.msra.mxu0 0.0
      %797 = vmatprep.subr.mxu0 0.0
      %798 = vmatpush1.msra.mxu0 0.0
      %799 = vmatprep.subr.mxu0 0.0
      %800 = vmatpush1.msra.mxu0 0.0
      %801 = vmatprep.subr.mxu0 0.0
      %802 = vmatpush1.msra.mxu0 0.0
      %803 = vmatprep.subr.mxu0 0.0
      %804 = vmatpush1.msra.mxu0 0.0
      %805 = vmatprep.subr.mxu0 0.0
      %806 = vmatpush1.msra.mxu0 0.0
      %807 = vmatprep.subr.mxu0 0.0
      %808 = vmatpush1.msra.mxu0 0.0
      %809 = vmatprep.subr.mxu0 0.0
      %810 = vmatpush1.msra.mxu0 0.0
      %811 = vmatprep.subr.mxu0 0.0
      %812 = vmatpush1.msra.mxu0 0.0
      %813 = vmatprep.subr.mxu0 0.0
      %814 = vmatpush1.msra.mxu0 0.0
      %815 = vmatprep.subr.mxu0 0.0
      %816 = vmatpush1.msra.mxu0 0.0
      %817 = vmatprep.subr.mxu0 0.0
      %818 = vmatpush1.msra.mxu0 0.0
      %819 = vmatprep.subr.mxu0 0.0
      %820 = vmatpush1.msra.mxu0 0.0
      %821 = vmatprep.subr.mxu0 0.0
      %822 = vmatpush1.msra.mxu0 0.0
      %823 = vmatprep.subr.mxu0 0.0
      %824 = vmatpush1.msra.mxu0 0.0
      %825 = vmatprep.subr.mxu0 0.0
      %826 = vmatpush1.msra.mxu0 0.0
      %827 = vmatprep.subr.mxu0 0.0
      %828 = vmatpush1.msra.mxu0 0.0
      %829 = vmatprep.subr.mxu0 0.0
      %830 = vmatpush1.msra.mxu0 0.0
      %831 = vmatprep.subr.mxu0 0.0
      %832 = vmatpush1.msra.mxu0 0.0
      %833 = vmatprep.subr.mxu0 0.0
      %834 = vmatpush1.msra.mxu0 0.0
      %835 = vmatprep.subr.mxu0 0.0
      %836 = vmatpush1.msra.mxu0 0.0
      %837 = vmatprep.subr.mxu0 0.0
      %838 = vmatpush1.msra.mxu0 0.0
      %839 = vmatprep.subr.mxu0 0.0
      %840 = vmatpush1.msra.mxu0 0.0
      %841 = vmatprep.subr.mxu0 0.0
      %842 = vmatpush1.msra.mxu0 0.0
      %843 = vmatprep.subr.mxu0 0.0
      %844 = vmatpush1.msra.mxu0 0.0
      %845 = vmatprep.mubr.f32.mxu0 0.0
      %846 = vmatmul.mubr.f32.gmra.mrb[0].mxu0 %v779
      %v847 = vpop.f32.mrb[0].mxu0
      %v848 = vadd.f32 0.0, %v847
      %v849 = vpop.f32.mrb[0].mxu0
      %850 = vdwg.mxu0
      %v851 = vld [vmem:[%s2] sm:$0xff]
      %v853 = vsel %vm266, %v337, 0
      %v856 = vsel %vm266, %v410, 0
      %v859 = vsel %vm266, %v483, 0
      %v862 = vsel %vm266, %v556, 0
      %v865 = vsel %vm266, %v629, 0
      %v868 = vsel %vm266, %v702, 0
      %v871 = vsel %vm266, %v775, 0
      %v874 = vsel %vm266, %v848, 0
      %876 = vmatprep.subr.mxu0 0.0
      %877 = vmatpush1.msra.mxu0 %v851
      %878 = vmatprep.subr.mxu0 0.0
      %879 = vmatpush1.msra.mxu0 0.0
      %880 = vmatprep.subr.mxu0 0.0
      %881 = vmatpush1.msra.mxu0 0.0
      %882 = vmatprep.subr.mxu0 0.0
      %883 = vmatpush1.msra.mxu0 0.0
      %884 = vmatprep.subr.mxu0 0.0
      %885 = vmatpush1.msra.mxu0 0.0
      %886 = vmatprep.subr.mxu0 0.0
      %887 = vmatpush1.msra.mxu0 0.0
      %888 = vmatprep.subr.mxu0 0.0
      %889 = vmatpush1.msra.mxu0 0.0
      %890 = vmatprep.subr.mxu0 0.0
      %891 = vmatpush1.msra.mxu0 0.0
      %892 = vmatprep.subr.mxu0 0.0
      %893 = vmatpush1.msra.mxu0 0.0
      %894 = vmatprep.subr.mxu0 0.0
      %895 = vmatpush1.msra.mxu0 0.0
      %896 = vmatprep.subr.mxu0 0.0
      %897 = vmatpush1.msra.mxu0 0.0
      %898 = vmatprep.subr.mxu0 0.0
      %899 = vmatpush1.msra.mxu0 0.0
      %900 = vmatprep.subr.mxu0 0.0
      %901 = vmatpush1.msra.mxu0 0.0
      %902 = vmatprep.subr.mxu0 0.0
      %903 = vmatpush1.msra.mxu0 0.0
      %904 = vmatprep.subr.mxu0 0.0
      %905 = vmatpush1.msra.mxu0 0.0
      %906 = vmatprep.subr.mxu0 0.0
      %907 = vmatpush1.msra.mxu0 0.0
      %908 = vmatprep.subr.mxu0 0.0
      %909 = vmatpush1.msra.mxu0 0.0
      %910 = vmatprep.subr.mxu0 0.0
      %911 = vmatpush1.msra.mxu0 0.0
      %912 = vmatprep.subr.mxu0 0.0
      %913 = vmatpush1.msra.mxu0 0.0
      %914 = vmatprep.subr.mxu0 0.0
      %915 = vmatpush1.msra.mxu0 0.0
      %916 = vmatprep.subr.mxu0 0.0
      %917 = vmatpush1.msra.mxu0 0.0
      %918 = vmatprep.subr.mxu0 0.0
      %919 = vmatpush1.msra.mxu0 0.0
      %920 = vmatprep.subr.mxu0 0.0
      %921 = vmatpush1.msra.mxu0 0.0
      %922 = vmatprep.subr.mxu0 0.0
      %923 = vmatpush1.msra.mxu0 0.0
      %924 = vmatprep.subr.mxu0 0.0
      %925 = vmatpush1.msra.mxu0 0.0
      %926 = vmatprep.subr.mxu0 0.0
      %927 = vmatpush1.msra.mxu0 0.0
      %928 = vmatprep.subr.mxu0 0.0
      %929 = vmatpush1.msra.mxu0 0.0
      %930 = vmatprep.subr.mxu0 0.0
      %931 = vmatpush1.msra.mxu0 0.0
      %932 = vmatprep.subr.mxu0 0.0
      %933 = vmatpush1.msra.mxu0 0.0
      %934 = vmatprep.subr.mxu0 0.0
      %935 = vmatpush1.msra.mxu0 0.0
      %936 = vmatprep.subr.mxu0 0.0
      %937 = vmatpush1.msra.mxu0 0.0
      %938 = vmatprep.subr.mxu0 0.0
      %939 = vmatpush1.msra.mxu0 0.0
      %940 = vmatprep.mubr.f32.mxu0 0.0
      %941 = vmatmul.mubr.f32.gmra.mrb[0].mxu0 %v853
      %v942 = vpop.f32.mrb[0].mxu0
      %v943 = vadd.f32 0.0, %v942
      %v944 = vpop.f32.mrb[0].mxu0
      %945 = vmatprep.mubr.f32.mxu0 0.0
      %946 = vmatmul.mubr.f32.gmra.mrb[0].mxu0 %v856
      %v947 = vpop.f32.mrb[0].mxu0
      %v948 = vadd.f32 0.0, %v947
      %v949 = vpop.f32.mrb[0].mxu0
      %950 = vmatprep.mubr.f32.mxu0 0.0
      %951 = vmatmul.mubr.f32.gmra.mrb[0].mxu0 %v859
      %v952 = vpop.f32.mrb[0].mxu0
      %v953 = vadd.f32 0.0, %v952
      %v954 = vpop.f32.mrb[0].mxu0
      %955 = vmatprep.mubr.f32.mxu0 0.0
      %956 = vmatmul.mubr.f32.gmra.mrb[0].mxu0 %v862
      %v957 = vpop.f32.mrb[0].mxu0
      %v958 = vadd.f32 0.0, %v957
      %v959 = vpop.f32.mrb[0].mxu0
      %960 = vmatprep.mubr.f32.mxu0 0.0
      %961 = vmatmul.mubr.f32.gmra.mrb[0].mxu0 %v865
      %v962 = vpop.f32.mrb[0].mxu0
      %v963 = vadd.f32 0.0, %v962
      %v964 = vpop.f32.mrb[0].mxu0
      %965 = vmatprep.mubr.f32.mxu0 0.0
      %966 = vmatmul.mubr.f32.gmra.mrb[0].mxu0 %v868
      %v967 = vpop.f32.mrb[0].mxu0
      %v968 = vadd.f32 0.0, %v967
      %v969 = vpop.f32.mrb[0].mxu0
      %970 = vmatprep.mubr.f32.mxu0 0.0
      %971 = vmatmul.mubr.f32.gmra.mrb[0].mxu0 %v871
      %v972 = vpop.f32.mrb[0].mxu0
      %v973 = vadd.f32 0.0, %v972
      %v974 = vpop.f32.mrb[0].mxu0
      %975 = vmatprep.mubr.f32.mxu0 0.0
      %976 = vmatmul.mubr.f32.gmra.mrb[0].mxu0 %v874
      %v977 = vpop.f32.mrb[0].mxu0
      %v978 = vadd.f32 0.0, %v977
      %v979 = vpop.f32.mrb[0].mxu0
      %980 = vdwg.mxu0
      %v981 = vmax.f32 %v943, 0.0
      %v982 = vmax.f32 %v948, 0.0
      %v983 = vmax.f32 %v953, 0.0
      %v984 = vmax.f32 %v958, 0.0
      %v985 = vmax.f32 %v963, 0.0
      %v986 = vmax.f32 %v968, 0.0
      %v987 = vmax.f32 %v973, 0.0
      %v988 = vmax.f32 %v978, 0.0
      %989 = vmatprep.subr.mxu0 0.0
      %990 = vmatpush1.msra.mxu0 %v981
      %991 = vmatprep.subr.mxu0 0.0
      %992 = vmatpush1.msra.mxu0 0.0
      %993 = vmatprep.subr.mxu0 0.0
      %994 = vmatpush1.msra.mxu0 0.0
      %995 = vmatprep.subr.mxu0 0.0
      %996 = vmatpush1.msra.mxu0 0.0
      %997 = vmatprep.subr.mxu0 0.0
      %998 = vmatpush1.msra.mxu0 0.0
      %999 = vmatprep.subr.mxu0 0.0
      %1000 = vmatpush1.msra.mxu0 0.0
      %1001 = vmatprep.subr.mxu0 0.0
      %1002 = vmatpush1.msra.mxu0 0.0
      %1003 = vmatprep.subr.mxu0 0.0
      %1004 = vmatpush1.msra.mxu0 0.0
      %1005 = vmatprep.subr.mxu0 0.0
      %1006 = vmatpush1.msra.mxu0 0.0
      %1007 = vmatprep.subr.mxu0 0.0
      %1008 = vmatpush1.msra.mxu0 0.0
      %1009 = vmatprep.subr.mxu0 0.0
      %1010 = vmatpush1.msra.mxu0 0.0
      %1011 = vmatprep.subr.mxu0 0.0
      %1012 = vmatpush1.msra.mxu0 0.0
      %1013 = vmatprep.subr.mxu0 0.0
      %1014 = vmatpush1.msra.mxu0 0.0
      %1015 = vmatprep.subr.mxu0 0.0
      %1016 = vmatpush1.msra.mxu0 0.0
      %1017 = vmatprep.subr.mxu0 0.0
      %1018 = vmatpush1.msra.mxu0 0.0
      %1019 = vmatprep.subr.mxu0 0.0
      %1020 = vmatpush1.msra.mxu0 0.0
      %1021 = vmatprep.subr.mxu0 0.0
      %1022 = vmatpush1.msra.mxu0 0.0
      %1023 = vmatprep.subr.mxu0 0.0
      %1024 = vmatpush1.msra.mxu0 0.0
      %1025 = vmatprep.subr.mxu0 0.0
      %1026 = vmatpush1.msra.mxu0 0.0
      %1027 = vmatprep.subr.mxu0 0.0
      %1028 = vmatpush1.msra.mxu0 0.0
      %1029 = vmatprep.subr.mxu0 0.0
      %1030 = vmatpush1.msra.mxu0 0.0
      %1031 = vmatprep.subr.mxu0 0.0
      %1032 = vmatpush1.msra.mxu0 0.0
      %1033 = vmatprep.subr.mxu0 0.0
      %1034 = vmatpush1.msra.mxu0 0.0
      %1035 = vmatprep.subr.mxu0 0.0
      %1036 = vmatpush1.msra.mxu0 0.0
      %1037 = vmatprep.subr.mxu0 0.0
      %1038 = vmatpush1.msra.mxu0 0.0
      %1039 = vmatprep.subr.mxu0 0.0
      %1040 = vmatpush1.msra.mxu0 0.0
      %1041 = vmatprep.subr.mxu0 0.0
      %1042 = vmatpush1.msra.mxu0 0.0
      %1043 = vmatprep.subr.mxu0 0.0
      %1044 = vmatpush1.msra.mxu0 0.0
      %1045 = vmatprep.subr.mxu0 0.0
      %1046 = vmatpush1.msra.mxu0 0.0
      %1047 = vmatprep.subr.mxu0 0.0
      %1048 = vmatpush1.msra.mxu0 0.0
      %1049 = vmatprep.subr.mxu0 0.0
      %1050 = vmatpush1.msra.mxu0 0.0
      %1051 = vmatprep.subr.mxu0 0.0
      %1052 = vmatpush1.msra.mxu0 0.0
      %1053 = vmatprep.mubr.f32.mxu0 0.0
      %1054 = vmatmul.mubr.f32.gmra.mrb[0].mxu0 %v268
      %v1055 = vpop.f32.mrb[0].mxu0
      %v1056 = vadd.f32 0.0, %v1055
      %v1057 = vpop.f32.mrb[0].mxu0
      %1058 = vdwg.mxu0
      %1059 = vmatprep.subr.mxu0 0.0
      %1060 = vmatpush1.msra.mxu0 %v982
      %1061 = vmatprep.subr.mxu0 0.0
      %1062 = vmatpush1.msra.mxu0 0.0
      %1063 = vmatprep.subr.mxu0 0.0
      %1064 = vmatpush1.msra.mxu0 0.0
      %1065 = vmatprep.subr.mxu0 0.0
      %1066 = vmatpush1.msra.mxu0 0.0
      %1067 = vmatprep.subr.mxu0 0.0
      %1068 = vmatpush1.msra.mxu0 0.0
      %1069 = vmatprep.subr.mxu0 0.0
      %1070 = vmatpush1.msra.mxu0 0.0
      %1071 = vmatprep.subr.mxu0 0.0
      %1072 = vmatpush1.msra.mxu0 0.0
      %1073 = vmatprep.subr.mxu0 0.0
      %1074 = vmatpush1.msra.mxu0 0.0
      %1075 = vmatprep.subr.mxu0 0.0
      %1076 = vmatpush1.msra.mxu0 0.0
      %1077 = vmatprep.subr.mxu0 0.0
      %1078 = vmatpush1.msra.mxu0 0.0
      %1079 = vmatprep.subr.mxu0 0.0
      %1080 = vmatpush1.msra.mxu0 0.0
      %1081 = vmatprep.subr.mxu0 0.0
      %1082 = vmatpush1.msra.mxu0 0.0
      %1083 = vmatprep.subr.mxu0 0.0
      %1084 = vmatpush1.msra.mxu0 0.0
      %1085 = vmatprep.subr.mxu0 0.0
      %1086 = vmatpush1.msra.mxu0 0.0
      %1087 = vmatprep.subr.mxu0 0.0
      %1088 = vmatpush1.msra.mxu0 0.0
      %1089 = vmatprep.subr.mxu0 0.0
      %1090 = vmatpush1.msra.mxu0 0.0
      %1091 = vmatprep.subr.mxu0 0.0
      %1092 = vmatpush1.msra.mxu0 0.0
      %1093 = vmatprep.subr.mxu0 0.0
      %1094 = vmatpush1.msra.mxu0 0.0
      %1095 = vmatprep.subr.mxu0 0.0
      %1096 = vmatpush1.msra.mxu0 0.0
      %1097 = vmatprep.subr.mxu0 0.0
      %1098 = vmatpush1.msra.mxu0 0.0
      %1099 = vmatprep.subr.mxu0 0.0
      %1100 = vmatpush1.msra.mxu0 0.0
      %1101 = vmatprep.subr.mxu0 0.0
      %1102 = vmatpush1.msra.mxu0 0.0
      %1103 = vmatprep.subr.mxu0 0.0
      %1104 = vmatpush1.msra.mxu0 0.0
      %1105 = vmatprep.subr.mxu0 0.0
      %1106 = vmatpush1.msra.mxu0 0.0
      %1107 = vmatprep.subr.mxu0 0.0
      %1108 = vmatpush1.msra.mxu0 0.0
      %1109 = vmatprep.subr.mxu0 0.0
      %1110 = vmatpush1.msra.mxu0 0.0
      %1111 = vmatprep.subr.mxu0 0.0
      %1112 = vmatpush1.msra.mxu0 0.0
      %1113 = vmatprep.subr.mxu0 0.0
      %1114 = vmatpush1.msra.mxu0 0.0
      %1115 = vmatprep.subr.mxu0 0.0
      %1116 = vmatpush1.msra.mxu0 0.0
      %1117 = vmatprep.subr.mxu0 0.0
      %1118 = vmatpush1.msra.mxu0 0.0
      %1119 = vmatprep.subr.mxu0 0.0
      %1120 = vmatpush1.msra.mxu0 0.0
      %1121 = vmatprep.subr.mxu0 0.0
      %1122 = vmatpush1.msra.mxu0 0.0
      %1123 = vmatprep.mubr.f32.mxu0 0.0
      %1124 = vmatmul.mubr.f32.gmra.mrb[0].mxu0 %v341
      %v1125 = vpop.f32.mrb[0].mxu0
      %v1126 = vadd.f32 0.0, %v1125
      %v1127 = vpop.f32.mrb[0].mxu0
      %1128 = vdwg.mxu0
      %1129 = vmatprep.subr.mxu0 0.0
      %1130 = vmatpush1.msra.mxu0 %v983
      %1131 = vmatprep.subr.mxu0 0.0
      %1132 = vmatpush1.msra.mxu0 0.0
      %1133 = vmatprep.subr.mxu0 0.0
      %1134 = vmatpush1.msra.mxu0 0.0
      %1135 = vmatprep.subr.mxu0 0.0
      %1136 = vmatpush1.msra.mxu0 0.0
      %1137 = vmatprep.subr.mxu0 0.0
      %1138 = vmatpush1.msra.mxu0 0.0
      %1139 = vmatprep.subr.mxu0 0.0
      %1140 = vmatpush1.msra.mxu0 0.0
      %1141 = vmatprep.subr.mxu0 0.0
      %1142 = vmatpush1.msra.mxu0 0.0
      %1143 = vmatprep.subr.mxu0 0.0
      %1144 = vmatpush1.msra.mxu0 0.0
      %1145 = vmatprep.subr.mxu0 0.0
      %1146 = vmatpush1.msra.mxu0 0.0
      %1147 = vmatprep.subr.mxu0 0.0
      %1148 = vmatpush1.msra.mxu0 0.0
      %1149 = vmatprep.subr.mxu0 0.0
      %1150 = vmatpush1.msra.mxu0 0.0
      %1151 = vmatprep.subr.mxu0 0.0
      %1152 = vmatpush1.msra.mxu0 0.0
      %1153 = vmatprep.subr.mxu0 0.0
      %1154 = vmatpush1.msra.mxu0 0.0
      %1155 = vmatprep.subr.mxu0 0.0
      %1156 = vmatpush1.msra.mxu0 0.0
      %1157 = vmatprep.subr.mxu0 0.0
      %1158 = vmatpush1.msra.mxu0 0.0
      %1159 = vmatprep.subr.mxu0 0.0
      %1160 = vmatpush1.msra.mxu0 0.0
      %1161 = vmatprep.subr.mxu0 0.0
      %1162 = vmatpush1.msra.mxu0 0.0
      %1163 = vmatprep.subr.mxu0 0.0
      %1164 = vmatpush1.msra.mxu0 0.0
      %1165 = vmatprep.subr.mxu0 0.0
      %1166 = vmatpush1.msra.mxu0 0.0
      %1167 = vmatprep.subr.mxu0 0.0
      %1168 = vmatpush1.msra.mxu0 0.0
      %1169 = vmatprep.subr.mxu0 0.0
      %1170 = vmatpush1.msra.mxu0 0.0
      %1171 = vmatprep.subr.mxu0 0.0
      %1172 = vmatpush1.msra.mxu0 0.0
      %1173 = vmatprep.subr.mxu0 0.0
      %1174 = vmatpush1.msra.mxu0 0.0
      %1175 = vmatprep.subr.mxu0 0.0
      %1176 = vmatpush1.msra.mxu0 0.0
      %1177 = vmatprep.subr.mxu0 0.0
      %1178 = vmatpush1.msra.mxu0 0.0
      %1179 = vmatprep.subr.mxu0 0.0
      %1180 = vmatpush1.msra.mxu0 0.0
      %1181 = vmatprep.subr.mxu0 0.0
      %1182 = vmatpush1.msra.mxu0 0.0
      %1183 = vmatprep.subr.mxu0 0.0
      %1184 = vmatpush1.msra.mxu0 0.0
      %1185 = vmatprep.subr.mxu0 0.0
      %1186 = vmatpush1.msra.mxu0 0.0
      %1187 = vmatprep.subr.mxu0 0.0
      %1188 = vmatpush1.msra.mxu0 0.0
      %1189 = vmatprep.subr.mxu0 0.0
      %1190 = vmatpush1.msra.mxu0 0.0
      %1191 = vmatprep.subr.mxu0 0.0
      %1192 = vmatpush1.msra.mxu0 0.0
      %1193 = vmatprep.mubr.f32.mxu0 0.0
      %1194 = vmatmul.mubr.f32.gmra.mrb[0].mxu0 %v414
      %v1195 = vpop.f32.mrb[0].mxu0
      %v1196 = vadd.f32 0.0, %v1195
      %v1197 = vpop.f32.mrb[0].mxu0
      %1198 = vdwg.mxu0
      %1199 = vmatprep.subr.mxu0 0.0
      %1200 = vmatpush1.msra.mxu0 %v984
      %1201 = vmatprep.subr.mxu0 0.0
      %1202 = vmatpush1.msra.mxu0 0.0
      %1203 = vmatprep.subr.mxu0 0.0
      %1204 = vmatpush1.msra.mxu0 0.0
      %1205 = vmatprep.subr.mxu0 0.0
      %1206 = vmatpush1.msra.mxu0 0.0
      %1207 = vmatprep.subr.mxu0 0.0
      %1208 = vmatpush1.msra.mxu0 0.0
      %1209 = vmatprep.subr.mxu0 0.0
      %1210 = vmatpush1.msra.mxu0 0.0
      %1211 = vmatprep.subr.mxu0 0.0
      %1212 = vmatpush1.msra.mxu0 0.0
      %1213 = vmatprep.subr.mxu0 0.0
      %1214 = vmatpush1.msra.mxu0 0.0
      %1215 = vmatprep.subr.mxu0 0.0
      %1216 = vmatpush1.msra.mxu0 0.0
      %1217 = vmatprep.subr.mxu0 0.0
      %1218 = vmatpush1.msra.mxu0 0.0
      %1219 = vmatprep.subr.mxu0 0.0
      %1220 = vmatpush1.msra.mxu0 0.0
      %1221 = vmatprep.subr.mxu0 0.0
      %1222 = vmatpush1.msra.mxu0 0.0
      %1223 = vmatprep.subr.mxu0 0.0
      %1224 = vmatpush1.msra.mxu0 0.0
      %1225 = vmatprep.subr.mxu0 0.0
      %1226 = vmatpush1.msra.mxu0 0.0
      %1227 = vmatprep.subr.mxu0 0.0
      %1228 = vmatpush1.msra.mxu0 0.0
      %1229 = vmatprep.subr.mxu0 0.0
      %1230 = vmatpush1.msra.mxu0 0.0
      %1231 = vmatprep.subr.mxu0 0.0
      %1232 = vmatpush1.msra.mxu0 0.0
      %1233 = vmatprep.subr.mxu0 0.0
      %1234 = vmatpush1.msra.mxu0 0.0
      %1235 = vmatprep.subr.mxu0 0.0
      %1236 = vmatpush1.msra.mxu0 0.0
      %1237 = vmatprep.subr.mxu0 0.0
      %1238 = vmatpush1.msra.mxu0 0.0
      %1239 = vmatprep.subr.mxu0 0.0
      %1240 = vmatpush1.msra.mxu0 0.0
      %1241 = vmatprep.subr.mxu0 0.0
      %1242 = vmatpush1.msra.mxu0 0.0
      %1243 = vmatprep.subr.mxu0 0.0
      %1244 = vmatpush1.msra.mxu0 0.0
      %1245 = vmatprep.subr.mxu0 0.0
      %1246 = vmatpush1.msra.mxu0 0.0
      %1247 = vmatprep.subr.mxu0 0.0
      %1248 = vmatpush1.msra.mxu0 0.0
      %1249 = vmatprep.subr.mxu0 0.0
      %1250 = vmatpush1.msra.mxu0 0.0
      %1251 = vmatprep.subr.mxu0 0.0
      %1252 = vmatpush1.msra.mxu0 0.0
      %1253 = vmatprep.subr.mxu0 0.0
      %1254 = vmatpush1.msra.mxu0 0.0
      %1255 = vmatprep.subr.mxu0 0.0
      %1256 = vmatpush1.msra.mxu0 0.0
      %1257 = vmatprep.subr.mxu0 0.0
      %1258 = vmatpush1.msra.mxu0 0.0
      %1259 = vmatprep.subr.mxu0 0.0
      %1260 = vmatpush1.msra.mxu0 0.0
      %1261 = vmatprep.subr.mxu0 0.0
      %1262 = vmatpush1.msra.mxu0 0.0
      %1263 = vmatprep.mubr.f32.mxu0 0.0
      %1264 = vmatmul.mubr.f32.gmra.mrb[0].mxu0 %v487
      %v1265 = vpop.f32.mrb[0].mxu0
      %v1266 = vadd.f32 0.0, %v1265
      %v1267 = vpop.f32.mrb[0].mxu0
      %1268 = vdwg.mxu0
      %1269 = vmatprep.subr.mxu0 0.0
      %1270 = vmatpush1.msra.mxu0 %v985
      %1271 = vmatprep.subr.mxu0 0.0
      %1272 = vmatpush1.msra.mxu0 0.0
      %1273 = vmatprep.subr.mxu0 0.0
      %1274 = vmatpush1.msra.mxu0 0.0
      %1275 = vmatprep.subr.mxu0 0.0
      %1276 = vmatpush1.msra.mxu0 0.0
      %1277 = vmatprep.subr.mxu0 0.0
      %1278 = vmatpush1.msra.mxu0 0.0
      %1279 = vmatprep.subr.mxu0 0.0
      %1280 = vmatpush1.msra.mxu0 0.0
      %1281 = vmatprep.subr.mxu0 0.0
      %1282 = vmatpush1.msra.mxu0 0.0
      %1283 = vmatprep.subr.mxu0 0.0
      %1284 = vmatpush1.msra.mxu0 0.0
      %1285 = vmatprep.subr.mxu0 0.0
      %1286 = vmatpush1.msra.mxu0 0.0
      %1287 = vmatprep.subr.mxu0 0.0
      %1288 = vmatpush1.msra.mxu0 0.0
      %1289 = vmatprep.subr.mxu0 0.0
      %1290 = vmatpush1.msra.mxu0 0.0
      %1291 = vmatprep.subr.mxu0 0.0
      %1292 = vmatpush1.msra.mxu0 0.0
      %1293 = vmatprep.subr.mxu0 0.0
      %1294 = vmatpush1.msra.mxu0 0.0
      %1295 = vmatprep.subr.mxu0 0.0
      %1296 = vmatpush1.msra.mxu0 0.0
      %1297 = vmatprep.subr.mxu0 0.0
      %1298 = vmatpush1.msra.mxu0 0.0
      %1299 = vmatprep.subr.mxu0 0.0
      %1300 = vmatpush1.msra.mxu0 0.0
      %1301 = vmatprep.subr.mxu0 0.0
      %1302 = vmatpush1.msra.mxu0 0.0
      %1303 = vmatprep.subr.mxu0 0.0
      %1304 = vmatpush1.msra.mxu0 0.0
      %1305 = vmatprep.subr.mxu0 0.0
      %1306 = vmatpush1.msra.mxu0 0.0
      %1307 = vmatprep.subr.mxu0 0.0
      %1308 = vmatpush1.msra.mxu0 0.0
      %1309 = vmatprep.subr.mxu0 0.0
      %1310 = vmatpush1.msra.mxu0 0.0
      %1311 = vmatprep.subr.mxu0 0.0
      %1312 = vmatpush1.msra.mxu0 0.0
      %1313 = vmatprep.subr.mxu0 0.0
      %1314 = vmatpush1.msra.mxu0 0.0
      %1315 = vmatprep.subr.mxu0 0.0
      %1316 = vmatpush1.msra.mxu0 0.0
      %1317 = vmatprep.subr.mxu0 0.0
      %1318 = vmatpush1.msra.mxu0 0.0
      %1319 = vmatprep.subr.mxu0 0.0
      %1320 = vmatpush1.msra.mxu0 0.0
      %1321 = vmatprep.subr.mxu0 0.0
      %1322 = vmatpush1.msra.mxu0 0.0
      %1323 = vmatprep.subr.mxu0 0.0
      %1324 = vmatpush1.msra.mxu0 0.0
      %1325 = vmatprep.subr.mxu0 0.0
      %1326 = vmatpush1.msra.mxu0 0.0
      %1327 = vmatprep.subr.mxu0 0.0
      %1328 = vmatpush1.msra.mxu0 0.0
      %1329 = vmatprep.subr.mxu0 0.0
      %1330 = vmatpush1.msra.mxu0 0.0
      %1331 = vmatprep.subr.mxu0 0.0
      %1332 = vmatpush1.msra.mxu0 0.0
      %1333 = vmatprep.mubr.f32.mxu0 0.0
      %1334 = vmatmul.mubr.f32.gmra.mrb[0].mxu0 %v560
      %v1335 = vpop.f32.mrb[0].mxu0
      %v1336 = vadd.f32 0.0, %v1335
      %v1337 = vpop.f32.mrb[0].mxu0
      %1338 = vdwg.mxu0
      %1339 = vmatprep.subr.mxu0 0.0
      %1340 = vmatpush1.msra.mxu0 %v986
      %1341 = vmatprep.subr.mxu0 0.0
      %1342 = vmatpush1.msra.mxu0 0.0
      %1343 = vmatprep.subr.mxu0 0.0
      %1344 = vmatpush1.msra.mxu0 0.0
      %1345 = vmatprep.subr.mxu0 0.0
      %1346 = vmatpush1.msra.mxu0 0.0
      %1347 = vmatprep.subr.mxu0 0.0
      %1348 = vmatpush1.msra.mxu0 0.0
      %1349 = vmatprep.subr.mxu0 0.0
      %1350 = vmatpush1.msra.mxu0 0.0
      %1351 = vmatprep.subr.mxu0 0.0
      %1352 = vmatpush1.msra.mxu0 0.0
      %1353 = vmatprep.subr.mxu0 0.0
      %1354 = vmatpush1.msra.mxu0 0.0
      %1355 = vmatprep.subr.mxu0 0.0
      %1356 = vmatpush1.msra.mxu0 0.0
      %1357 = vmatprep.subr.mxu0 0.0
      %1358 = vmatpush1.msra.mxu0 0.0
      %1359 = vmatprep.subr.mxu0 0.0
      %1360 = vmatpush1.msra.mxu0 0.0
      %1361 = vmatprep.subr.mxu0 0.0
      %1362 = vmatpush1.msra.mxu0 0.0
      %1363 = vmatprep.subr.mxu0 0.0
      %1364 = vmatpush1.msra.mxu0 0.0
      %1365 = vmatprep.subr.mxu0 0.0
      %1366 = vmatpush1.msra.mxu0 0.0
      %1367 = vmatprep.subr.mxu0 0.0
      %1368 = vmatpush1.msra.mxu0 0.0
      %1369 = vmatprep.subr.mxu0 0.0
      %1370 = vmatpush1.msra.mxu0 0.0
      %1371 = vmatprep.subr.mxu0 0.0
      %1372 = vmatpush1.msra.mxu0 0.0
      %1373 = vmatprep.subr.mxu0 0.0
      %1374 = vmatpush1.msra.mxu0 0.0
      %1375 = vmatprep.subr.mxu0 0.0
      %1376 = vmatpush1.msra.mxu0 0.0
      %1377 = vmatprep.subr.mxu0 0.0
      %1378 = vmatpush1.msra.mxu0 0.0
      %1379 = vmatprep.subr.mxu0 0.0
      %1380 = vmatpush1.msra.mxu0 0.0
      %1381 = vmatprep.subr.mxu0 0.0
      %1382 = vmatpush1.msra.mxu0 0.0
      %1383 = vmatprep.subr.mxu0 0.0
      %1384 = vmatpush1.msra.mxu0 0.0
      %1385 = vmatprep.subr.mxu0 0.0
      %1386 = vmatpush1.msra.mxu0 0.0
      %1387 = vmatprep.subr.mxu0 0.0
      %1388 = vmatpush1.msra.mxu0 0.0
      %1389 = vmatprep.subr.mxu0 0.0
      %1390 = vmatpush1.msra.mxu0 0.0
      %1391 = vmatprep.subr.mxu0 0.0
      %1392 = vmatpush1.msra.mxu0 0.0
      %1393 = vmatprep.subr.mxu0 0.0
      %1394 = vmatpush1.msra.mxu0 0.0
      %1395 = vmatprep.subr.mxu0 0.0
      %1396 = vmatpush1.msra.mxu0 0.0
      %1397 = vmatprep.subr.mxu0 0.0
      %1398 = vmatpush1.msra.mxu0 0.0
      %1399 = vmatprep.subr.mxu0 0.0
      %1400 = vmatpush1.msra.mxu0 0.0
      %1401 = vmatprep.subr.mxu0 0.0
      %1402 = vmatpush1.msra.mxu0 0.0
      %1403 = vmatprep.mubr.f32.mxu0 0.0
      %1404 = vmatmul.mubr.f32.gmra.mrb[0].mxu0 %v633
      %v1405 = vpop.f32.mrb[0].mxu0
      %v1406 = vadd.f32 0.0, %v1405
      %v1407 = vpop.f32.mrb[0].mxu0
      %1408 = vdwg.mxu0
      %1409 = vmatprep.subr.mxu0 0.0
      %1410 = vmatpush1.msra.mxu0 %v987
      %1411 = vmatprep.subr.mxu0 0.0
      %1412 = vmatpush1.msra.mxu0 0.0
      %1413 = vmatprep.subr.mxu0 0.0
      %1414 = vmatpush1.msra.mxu0 0.0
      %1415 = vmatprep.subr.mxu0 0.0
      %1416 = vmatpush1.msra.mxu0 0.0
      %1417 = vmatprep.subr.mxu0 0.0
      %1418 = vmatpush1.msra.mxu0 0.0
      %1419 = vmatprep.subr.mxu0 0.0
      %1420 = vmatpush1.msra.mxu0 0.0
      %1421 = vmatprep.subr.mxu0 0.0
      %1422 = vmatpush1.msra.mxu0 0.0
      %1423 = vmatprep.subr.mxu0 0.0
      %1424 = vmatpush1.msra.mxu0 0.0
      %1425 = vmatprep.subr.mxu0 0.0
      %1426 = vmatpush1.msra.mxu0 0.0
      %1427 = vmatprep.subr.mxu0 0.0
      %1428 = vmatpush1.msra.mxu0 0.0
      %1429 = vmatprep.subr.mxu0 0.0
      %1430 = vmatpush1.msra.mxu0 0.0
      %1431 = vmatprep.subr.mxu0 0.0
      %1432 = vmatpush1.msra.mxu0 0.0
      %1433 = vmatprep.subr.mxu0 0.0
      %1434 = vmatpush1.msra.mxu0 0.0
      %1435 = vmatprep.subr.mxu0 0.0
      %1436 = vmatpush1.msra.mxu0 0.0
      %1437 = vmatprep.subr.mxu0 0.0
      %1438 = vmatpush1.msra.mxu0 0.0
      %1439 = vmatprep.subr.mxu0 0.0
      %1440 = vmatpush1.msra.mxu0 0.0
      %1441 = vmatprep.subr.mxu0 0.0
      %1442 = vmatpush1.msra.mxu0 0.0
      %1443 = vmatprep.subr.mxu0 0.0
      %1444 = vmatpush1.msra.mxu0 0.0
      %1445 = vmatprep.subr.mxu0 0.0
      %1446 = vmatpush1.msra.mxu0 0.0
      %1447 = vmatprep.subr.mxu0 0.0
      %1448 = vmatpush1.msra.mxu0 0.0
      %1449 = vmatprep.subr.mxu0 0.0
      %1450 = vmatpush1.msra.mxu0 0.0
      %1451 = vmatprep.subr.mxu0 0.0
      %1452 = vmatpush1.msra.mxu0 0.0
      %1453 = vmatprep.subr.mxu0 0.0
      %1454 = vmatpush1.msra.mxu0 0.0
      %1455 = vmatprep.subr.mxu0 0.0
      %1456 = vmatpush1.msra.mxu0 0.0
      %1457 = vmatprep.subr.mxu0 0.0
      %1458 = vmatpush1.msra.mxu0 0.0
      %1459 = vmatprep.subr.mxu0 0.0
      %1460 = vmatpush1.msra.mxu0 0.0
      %1461 = vmatprep.subr.mxu0 0.0
      %1462 = vmatpush1.msra.mxu0 0.0
      %1463 = vmatprep.subr.mxu0 0.0
      %1464 = vmatpush1.msra.mxu0 0.0
      %1465 = vmatprep.subr.mxu0 0.0
      %1466 = vmatpush1.msra.mxu0 0.0
      %1467 = vmatprep.subr.mxu0 0.0
      %1468 = vmatpush1.msra.mxu0 0.0
      %1469 = vmatprep.subr.mxu0 0.0
      %1470 = vmatpush1.msra.mxu0 0.0
      %1471 = vmatprep.subr.mxu0 0.0
      %1472 = vmatpush1.msra.mxu0 0.0
      %1473 = vmatprep.mubr.f32.mxu0 0.0
      %1474 = vmatmul.mubr.f32.gmra.mrb[0].mxu0 %v706
      %v1475 = vpop.f32.mrb[0].mxu0
      %v1476 = vadd.f32 0.0, %v1475
      %v1477 = vpop.f32.mrb[0].mxu0
      %1478 = vdwg.mxu0
      %1479 = vmatprep.subr.mxu0 0.0
      %1480 = vmatpush1.msra.mxu0 %v988
      %1481 = vmatprep.subr.mxu0 0.0
      %1482 = vmatpush1.msra.mxu0 0.0
      %1483 = vmatprep.subr.mxu0 0.0
      %1484 = vmatpush1.msra.mxu0 0.0
      %1485 = vmatprep.subr.mxu0 0.0
      %1486 = vmatpush1.msra.mxu0 0.0
      %1487 = vmatprep.subr.mxu0 0.0
      %1488 = vmatpush1.msra.mxu0 0.0
      %1489 = vmatprep.subr.mxu0 0.0
      %1490 = vmatpush1.msra.mxu0 0.0
      %1491 = vmatprep.subr.mxu0 0.0
      %1492 = vmatpush1.msra.mxu0 0.0
      %1493 = vmatprep.subr.mxu0 0.0
      %1494 = vmatpush1.msra.mxu0 0.0
      %1495 = vmatprep.subr.mxu0 0.0
      %1496 = vmatpush1.msra.mxu0 0.0
      %1497 = vmatprep.subr.mxu0 0.0
      %1498 = vmatpush1.msra.mxu0 0.0
      %1499 = vmatprep.subr.mxu0 0.0
      %1500 = vmatpush1.msra.mxu0 0.0
      %1501 = vmatprep.subr.mxu0 0.0
      %1502 = vmatpush1.msra.mxu0 0.0
      %1503 = vmatprep.subr.mxu0 0.0
      %1504 = vmatpush1.msra.mxu0 0.0
      %1505 = vmatprep.subr.mxu0 0.0
      %1506 = vmatpush1.msra.mxu0 0.0
      %1507 = vmatprep.subr.mxu0 0.0
      %1508 = vmatpush1.msra.mxu0 0.0
      %1509 = vmatprep.subr.mxu0 0.0
      %1510 = vmatpush1.msra.mxu0 0.0
      %1511 = vmatprep.subr.mxu0 0.0
      %1512 = vmatpush1.msra.mxu0 0.0
      %1513 = vmatprep.subr.mxu0 0.0
      %1514 = vmatpush1.msra.mxu0 0.0
      %1515 = vmatprep.subr.mxu0 0.0
      %1516 = vmatpush1.msra.mxu0 0.0
      %1517 = vmatprep.subr.mxu0 0.0
      %1518 = vmatpush1.msra.mxu0 0.0
      %1519 = vmatprep.subr.mxu0 0.0
      %1520 = vmatpush1.msra.mxu0 0.0
      %1521 = vmatprep.subr.mxu0 0.0
      %1522 = vmatpush1.msra.mxu0 0.0
      %1523 = vmatprep.subr.mxu0 0.0
      %1524 = vmatpush1.msra.mxu0 0.0
      %1525 = vmatprep.subr.mxu0 0.0
      %1526 = vmatpush1.msra.mxu0 0.0
      %1527 = vmatprep.subr.mxu0 0.0
      %1528 = vmatpush1.msra.mxu0 0.0
      %1529 = vmatprep.subr.mxu0 0.0
      %1530 = vmatpush1.msra.mxu0 0.0
      %1531 = vmatprep.subr.mxu0 0.0
      %1532 = vmatpush1.msra.mxu0 0.0
      %1533 = vmatprep.subr.mxu0 0.0
      %1534 = vmatpush1.msra.mxu0 0.0
      %1535 = vmatprep.subr.mxu0 0.0
      %1536 = vmatpush1.msra.mxu0 0.0
      %1537 = vmatprep.subr.mxu0 0.0
      %1538 = vmatpush1.msra.mxu0 0.0
      %1539 = vmatprep.subr.mxu0 0.0
      %1540 = vmatpush1.msra.mxu0 0.0
      %1541 = vmatprep.subr.mxu0 0.0
      %1542 = vmatpush1.msra.mxu0 0.0
      %1543 = vmatprep.mubr.f32.mxu0 0.0
      %1544 = vmatmul.mubr.f32.gmra.mrb[0].mxu0 %v779
      %v1545 = vpop.f32.mrb[0].mxu0
      %v1546 = vadd.f32 0.0, %v1545
      %v1547 = vpop.f32.mrb[0].mxu0
      %1548 = vdwg.mxu0
      %v1549 = vld [vmem:[%s3] sm:$0xff]
      %v1551 = vsel %vm266, %v1056, 0
      %v1554 = vsel %vm266, %v1126, 0
      %v1557 = vsel %vm266, %v1196, 0
      %v1560 = vsel %vm266, %v1266, 0
      %v1563 = vsel %vm266, %v1336, 0
      %v1566 = vsel %vm266, %v1406, 0
      %v1569 = vsel %vm266, %v1476, 0
      %v1572 = vsel %vm266, %v1546, 0
      %1574 = vmatprep.subr.mxu0 0.0
      %1575 = vmatpush1.msra.mxu0 %v1549
      %1576 = vmatprep.subr.mxu0 0.0
      %1577 = vmatpush1.msra.mxu0 0.0
      %1578 = vmatprep.subr.mxu0 0.0
      %1579 = vmatpush1.msra.mxu0 0.0
      %1580 = vmatprep.subr.mxu0 0.0
      %1581 = vmatpush1.msra.mxu0 0.0
      %1582 = vmatprep.subr.mxu0 0.0
      %1583 = vmatpush1.msra.mxu0 0.0
      %1584 = vmatprep.subr.mxu0 0.0
      %1585 = vmatpush1.msra.mxu0 0.0
      %1586 = vmatprep.subr.mxu0 0.0
      %1587 = vmatpush1.msra.mxu0 0.0
      %1588 = vmatprep.subr.mxu0 0.0
      %1589 = vmatpush1.msra.mxu0 0.0
      %1590 = vmatprep.subr.mxu0 0.0
      %1591 = vmatpush1.msra.mxu0 0.0
      %1592 = vmatprep.subr.mxu0 0.0
      %1593 = vmatpush1.msra.mxu0 0.0
      %1594 = vmatprep.subr.mxu0 0.0
      %1595 = vmatpush1.msra.mxu0 0.0
      %1596 = vmatprep.subr.mxu0 0.0
      %1597 = vmatpush1.msra.mxu0 0.0
      %1598 = vmatprep.subr.mxu0 0.0
      %1599 = vmatpush1.msra.mxu0 0.0
      %1600 = vmatprep.subr.mxu0 0.0
      %1601 = vmatpush1.msra.mxu0 0.0
      %1602 = vmatprep.subr.mxu0 0.0
      %1603 = vmatpush1.msra.mxu0 0.0
      %1604 = vmatprep.subr.mxu0 0.0
      %1605 = vmatpush1.msra.mxu0 0.0
      %1606 = vmatprep.subr.mxu0 0.0
      %1607 = vmatpush1.msra.mxu0 0.0
      %1608 = vmatprep.subr.mxu0 0.0
      %1609 = vmatpush1.msra.mxu0 0.0
      %1610 = vmatprep.subr.mxu0 0.0
      %1611 = vmatpush1.msra.mxu0 0.0
      %1612 = vmatprep.subr.mxu0 0.0
      %1613 = vmatpush1.msra.mxu0 0.0
      %1614 = vmatprep.subr.mxu0 0.0
      %1615 = vmatpush1.msra.mxu0 0.0
      %1616 = vmatprep.subr.mxu0 0.0
      %1617 = vmatpush1.msra.mxu0 0.0
      %1618 = vmatprep.subr.mxu0 0.0
      %1619 = vmatpush1.msra.mxu0 0.0
      %1620 = vmatprep.subr.mxu0 0.0
      %1621 = vmatpush1.msra.mxu0 0.0
      %1622 = vmatprep.subr.mxu0 0.0
      %1623 = vmatpush1.msra.mxu0 0.0
      %1624 = vmatprep.subr.mxu0 0.0
      %1625 = vmatpush1.msra.mxu0 0.0
      %1626 = vmatprep.subr.mxu0 0.0
      %1627 = vmatpush1.msra.mxu0 0.0
      %1628 = vmatprep.subr.mxu0 0.0
      %1629 = vmatpush1.msra.mxu0 0.0
      %1630 = vmatprep.subr.mxu0 0.0
      %1631 = vmatpush1.msra.mxu0 0.0
      %1632 = vmatprep.subr.mxu0 0.0
      %1633 = vmatpush1.msra.mxu0 0.0
      %1634 = vmatprep.subr.mxu0 0.0
      %1635 = vmatpush1.msra.mxu0 0.0
      %1636 = vmatprep.subr.mxu0 0.0
      %1637 = vmatpush1.msra.mxu0 0.0
      %1638 = vmatprep.mubr.f32.mxu0 0.0
      %1639 = vmatmul.mubr.f32.gmra.mrb[0].mxu0 %v1551
      %v1640 = vpop.f32.mrb[0].mxu0
      %v1641 = vadd.f32 0.0, %v1640
      %v1642 = vpop.f32.mrb[0].mxu0
      %1643 = vmatprep.mubr.f32.mxu0 0.0
      %1644 = vmatmul.mubr.f32.gmra.mrb[0].mxu0 %v1554
      %v1645 = vpop.f32.mrb[0].mxu0
      %v1646 = vadd.f32 0.0, %v1645
      %v1647 = vpop.f32.mrb[0].mxu0
      %1648 = vmatprep.mubr.f32.mxu0 0.0
      %1649 = vmatmul.mubr.f32.gmra.mrb[0].mxu0 %v1557
      %v1650 = vpop.f32.mrb[0].mxu0
      %v1651 = vadd.f32 0.0, %v1650
      %v1652 = vpop.f32.mrb[0].mxu0
      %1653 = vmatprep.mubr.f32.mxu0 0.0
      %1654 = vmatmul.mubr.f32.gmra.mrb[0].mxu0 %v1560
      %v1655 = vpop.f32.mrb[0].mxu0
      %v1656 = vadd.f32 0.0, %v1655
      %v1657 = vpop.f32.mrb[0].mxu0
      %1658 = vmatprep.mubr.f32.mxu0 0.0
      %1659 = vmatmul.mubr.f32.gmra.mrb[0].mxu0 %v1563
      %v1660 = vpop.f32.mrb[0].mxu0
      %v1661 = vadd.f32 0.0, %v1660
      %v1662 = vpop.f32.mrb[0].mxu0
      %1663 = vmatprep.mubr.f32.mxu0 0.0
      %1664 = vmatmul.mubr.f32.gmra.mrb[0].mxu0 %v1566
      %v1665 = vpop.f32.mrb[0].mxu0
      %v1666 = vadd.f32 0.0, %v1665
      %v1667 = vpop.f32.mrb[0].mxu0
      %1668 = vmatprep.mubr.f32.mxu0 0.0
      %1669 = vmatmul.mubr.f32.gmra.mrb[0].mxu0 %v1569
      %v1670 = vpop.f32.mrb[0].mxu0
      %v1671 = vadd.f32 0.0, %v1670
      %v1672 = vpop.f32.mrb[0].mxu0
      %1673 = vmatprep.mubr.f32.mxu0 0.0
      %1674 = vmatmul.mubr.f32.gmra.mrb[0].mxu0 %v1572
      %v1675 = vpop.f32.mrb[0].mxu0
      %v1676 = vadd.f32 0.0, %v1675
      %v1677 = vpop.f32.mrb[0].mxu0
      %1678 = vdwg.mxu0
      %v1679 = vmax.f32 %v1641, 0.0
      %v1680 = vmax.f32 %v1646, 0.0
      %v1681 = vmax.f32 %v1651, 0.0
      %v1682 = vmax.f32 %v1656, 0.0
      %v1683 = vmax.f32 %v1661, 0.0
      %v1684 = vmax.f32 %v1666, 0.0
      %v1685 = vmax.f32 %v1671, 0.0
      %v1686 = vmax.f32 %v1676, 0.0
      %1687 = vmatprep.subr.mxu0 0.0
      %1688 = vmatpush1.msra.mxu0 %v1679
      %1689 = vmatprep.subr.mxu0 0.0
      %1690 = vmatpush1.msra.mxu0 0.0
      %1691 = vmatprep.subr.mxu0 0.0
      %1692 = vmatpush1.msra.mxu0 0.0
      %1693 = vmatprep.subr.mxu0 0.0
      %1694 = vmatpush1.msra.mxu0 0.0
      %1695 = vmatprep.subr.mxu0 0.0
      %1696 = vmatpush1.msra.mxu0 0.0
      %1697 = vmatprep.subr.mxu0 0.0
      %1698 = vmatpush1.msra.mxu0 0.0
      %1699 = vmatprep.subr.mxu0 0.0
      %1700 = vmatpush1.msra.mxu0 0.0
      %1701 = vmatprep.subr.mxu0 0.0
      %1702 = vmatpush1.msra.mxu0 0.0
      %1703 = vmatprep.subr.mxu0 0.0
      %1704 = vmatpush1.msra.mxu0 0.0
      %1705 = vmatprep.subr.mxu0 0.0
      %1706 = vmatpush1.msra.mxu0 0.0
      %1707 = vmatprep.subr.mxu0 0.0
      %1708 = vmatpush1.msra.mxu0 0.0
      %1709 = vmatprep.subr.mxu0 0.0
      %1710 = vmatpush1.msra.mxu0 0.0
      %1711 = vmatprep.subr.mxu0 0.0
      %1712 = vmatpush1.msra.mxu0 0.0
      %1713 = vmatprep.subr.mxu0 0.0
      %1714 = vmatpush1.msra.mxu0 0.0
      %1715 = vmatprep.subr.mxu0 0.0
      %1716 = vmatpush1.msra.mxu0 0.0
      %1717 = vmatprep.subr.mxu0 0.0
      %1718 = vmatpush1.msra.mxu0 0.0
      %1719 = vmatprep.subr.mxu0 0.0
      %1720 = vmatpush1.msra.mxu0 0.0
      %1721 = vmatprep.subr.mxu0 0.0
      %1722 = vmatpush1.msra.mxu0 0.0
      %1723 = vmatprep.subr.mxu0 0.0
      %1724 = vmatpush1.msra.mxu0 0.0
      %1725 = vmatprep.subr.mxu0 0.0
      %1726 = vmatpush1.msra.mxu0 0.0
      %1727 = vmatprep.subr.mxu0 0.0
      %1728 = vmatpush1.msra.mxu0 0.0
      %1729 = vmatprep.subr.mxu0 0.0
      %1730 = vmatpush1.msra.mxu0 0.0
      %1731 = vmatprep.subr.mxu0 0.0
      %1732 = vmatpush1.msra.mxu0 0.0
      %1733 = vmatprep.subr.mxu0 0.0
      %1734 = vmatpush1.msra.mxu0 0.0
      %1735 = vmatprep.subr.mxu0 0.0
      %1736 = vmatpush1.msra.mxu0 0.0
      %1737 = vmatprep.subr.mxu0 0.0
      %1738 = vmatpush1.msra.mxu0 0.0
      %1739 = vmatprep.subr.mxu0 0.0
      %1740 = vmatpush1.msra.mxu0 0.0
      %1741 = vmatprep.subr.mxu0 0.0
      %1742 = vmatpush1.msra.mxu0 0.0
      %1743 = vmatprep.subr.mxu0 0.0
      %1744 = vmatpush1.msra.mxu0 0.0
      %1745 = vmatprep.subr.mxu0 0.0
      %1746 = vmatpush1.msra.mxu0 0.0
      %1747 = vmatprep.subr.mxu0 0.0
      %1748 = vmatpush1.msra.mxu0 0.0
      %1749 = vmatprep.subr.mxu0 0.0
      %1750 = vmatpush1.msra.mxu0 0.0
      %1751 = vmatprep.mubr.f32.mxu0 0.0
      %1752 = vmatmul.mubr.f32.gmra.mrb[0].mxu0 %v268
      %v1753 = vpop.f32.mrb[0].mxu0
      %v1754 = vadd.f32 0.0, %v1753
      %v1755 = vpop.f32.mrb[0].mxu0
      %1756 = vdwg.mxu0
      %1757 = vmatprep.subr.mxu0 0.0
      %1758 = vmatpush1.msra.mxu0 %v1680
      %1759 = vmatprep.subr.mxu0 0.0
      %1760 = vmatpush1.msra.mxu0 0.0
      %1761 = vmatprep.subr.mxu0 0.0
      %1762 = vmatpush1.msra.mxu0 0.0
      %1763 = vmatprep.subr.mxu0 0.0
      %1764 = vmatpush1.msra.mxu0 0.0
      %1765 = vmatprep.subr.mxu0 0.0
      %1766 = vmatpush1.msra.mxu0 0.0
      %1767 = vmatprep.subr.mxu0 0.0
      %1768 = vmatpush1.msra.mxu0 0.0
      %1769 = vmatprep.subr.mxu0 0.0
      %1770 = vmatpush1.msra.mxu0 0.0
      %1771 = vmatprep.subr.mxu0 0.0
      %1772 = vmatpush1.msra.mxu0 0.0
      %1773 = vmatprep.subr.mxu0 0.0
      %1774 = vmatpush1.msra.mxu0 0.0
      %1775 = vmatprep.subr.mxu0 0.0
      %1776 = vmatpush1.msra.mxu0 0.0
      %1777 = vmatprep.subr.mxu0 0.0
      %1778 = vmatpush1.msra.mxu0 0.0
      %1779 = vmatprep.subr.mxu0 0.0
      %1780 = vmatpush1.msra.mxu0 0.0
      %1781 = vmatprep.subr.mxu0 0.0
      %1782 = vmatpush1.msra.mxu0 0.0
      %1783 = vmatprep.subr.mxu0 0.0
      %1784 = vmatpush1.msra.mxu0 0.0
      %1785 = vmatprep.subr.mxu0 0.0
      %1786 = vmatpush1.msra.mxu0 0.0
      %1787 = vmatprep.subr.mxu0 0.0
      %1788 = vmatpush1.msra.mxu0 0.0
      %1789 = vmatprep.subr.mxu0 0.0
      %1790 = vmatpush1.msra.mxu0 0.0
      %1791 = vmatprep.subr.mxu0 0.0
      %1792 = vmatpush1.msra.mxu0 0.0
      %1793 = vmatprep.subr.mxu0 0.0
      %1794 = vmatpush1.msra.mxu0 0.0
      %1795 = vmatprep.subr.mxu0 0.0
      %1796 = vmatpush1.msra.mxu0 0.0
      %1797 = vmatprep.subr.mxu0 0.0
      %1798 = vmatpush1.msra.mxu0 0.0
      %1799 = vmatprep.subr.mxu0 0.0
      %1800 = vmatpush1.msra.mxu0 0.0
      %1801 = vmatprep.subr.mxu0 0.0
      %1802 = vmatpush1.msra.mxu0 0.0
      %1803 = vmatprep.subr.mxu0 0.0
      %1804 = vmatpush1.msra.mxu0 0.0
      %1805 = vmatprep.subr.mxu0 0.0
      %1806 = vmatpush1.msra.mxu0 0.0
      %1807 = vmatprep.subr.mxu0 0.0
      %1808 = vmatpush1.msra.mxu0 0.0
      %1809 = vmatprep.subr.mxu0 0.0
      %1810 = vmatpush1.msra.mxu0 0.0
      %1811 = vmatprep.subr.mxu0 0.0
      %1812 = vmatpush1.msra.mxu0 0.0
      %1813 = vmatprep.subr.mxu0 0.0
      %1814 = vmatpush1.msra.mxu0 0.0
      %1815 = vmatprep.subr.mxu0 0.0
      %1816 = vmatpush1.msra.mxu0 0.0
      %1817 = vmatprep.subr.mxu0 0.0
      %1818 = vmatpush1.msra.mxu0 0.0
      %1819 = vmatprep.subr.mxu0 0.0
      %1820 = vmatpush1.msra.mxu0 0.0
      %1821 = vmatprep.mubr.f32.mxu0 0.0
      %1822 = vmatmul.mubr.f32.gmra.mrb[0].mxu0 %v341
      %v1823 = vpop.f32.mrb[0].mxu0
      %v1824 = vadd.f32 0.0, %v1823
      %v1825 = vpop.f32.mrb[0].mxu0
      %1826 = vdwg.mxu0
      %1827 = vmatprep.subr.mxu0 0.0
      %1828 = vmatpush1.msra.mxu0 %v1681
      %1829 = vmatprep.subr.mxu0 0.0
      %1830 = vmatpush1.msra.mxu0 0.0
      %1831 = vmatprep.subr.mxu0 0.0
      %1832 = vmatpush1.msra.mxu0 0.0
      %1833 = vmatprep.subr.mxu0 0.0
      %1834 = vmatpush1.msra.mxu0 0.0
      %1835 = vmatprep.subr.mxu0 0.0
      %1836 = vmatpush1.msra.mxu0 0.0
      %1837 = vmatprep.subr.mxu0 0.0
      %1838 = vmatpush1.msra.mxu0 0.0
      %1839 = vmatprep.subr.mxu0 0.0
      %1840 = vmatpush1.msra.mxu0 0.0
      %1841 = vmatprep.subr.mxu0 0.0
      %1842 = vmatpush1.msra.mxu0 0.0
      %1843 = vmatprep.subr.mxu0 0.0
      %1844 = vmatpush1.msra.mxu0 0.0
      %1845 = vmatprep.subr.mxu0 0.0
      %1846 = vmatpush1.msra.mxu0 0.0
      %1847 = vmatprep.subr.mxu0 0.0
      %1848 = vmatpush1.msra.mxu0 0.0
      %1849 = vmatprep.subr.mxu0 0.0
      %1850 = vmatpush1.msra.mxu0 0.0
      %1851 = vmatprep.subr.mxu0 0.0
      %1852 = vmatpush1.msra.mxu0 0.0
      %1853 = vmatprep.subr.mxu0 0.0
      %1854 = vmatpush1.msra.mxu0 0.0
      %1855 = vmatprep.subr.mxu0 0.0
      %1856 = vmatpush1.msra.mxu0 0.0
      %1857 = vmatprep.subr.mxu0 0.0
      %1858 = vmatpush1.msra.mxu0 0.0
      %1859 = vmatprep.subr.mxu0 0.0
      %1860 = vmatpush1.msra.mxu0 0.0
      %1861 = vmatprep.subr.mxu0 0.0
      %1862 = vmatpush1.msra.mxu0 0.0
      %1863 = vmatprep.subr.mxu0 0.0
      %1864 = vmatpush1.msra.mxu0 0.0
      %1865 = vmatprep.subr.mxu0 0.0
      %1866 = vmatpush1.msra.mxu0 0.0
      %1867 = vmatprep.subr.mxu0 0.0
      %1868 = vmatpush1.msra.mxu0 0.0
      %1869 = vmatprep.subr.mxu0 0.0
      %1870 = vmatpush1.msra.mxu0 0.0
      %1871 = vmatprep.subr.mxu0 0.0
      %1872 = vmatpush1.msra.mxu0 0.0
      %1873 = vmatprep.subr.mxu0 0.0
      %1874 = vmatpush1.msra.mxu0 0.0
      %1875 = vmatprep.subr.mxu0 0.0
      %1876 = vmatpush1.msra.mxu0 0.0
      %1877 = vmatprep.subr.mxu0 0.0
      %1878 = vmatpush1.msra.mxu0 0.0
      %1879 = vmatprep.subr.mxu0 0.0
      %1880 = vmatpush1.msra.mxu0 0.0
      %1881 = vmatprep.subr.mxu0 0.0
      %1882 = vmatpush1.msra.mxu0 0.0
      %1883 = vmatprep.subr.mxu0 0.0
      %1884 = vmatpush1.msra.mxu0 0.0
      %1885 = vmatprep.subr.mxu0 0.0
      %1886 = vmatpush1.msra.mxu0 0.0
      %1887 = vmatprep.subr.mxu0 0.0
      %1888 = vmatpush1.msra.mxu0 0.0
      %1889 = vmatprep.subr.mxu0 0.0
      %1890 = vmatpush1.msra.mxu0 0.0
      %1891 = vmatprep.mubr.f32.mxu0 0.0
      %1892 = vmatmul.mubr.f32.gmra.mrb[0].mxu0 %v414
      %v1893 = vpop.f32.mrb[0].mxu0
      %v1894 = vadd.f32 0.0, %v1893
      %v1895 = vpop.f32.mrb[0].mxu0
      %1896 = vdwg.mxu0
      %1897 = vmatprep.subr.mxu0 0.0
      %1898 = vmatpush1.msra.mxu0 %v1682
      %1899 = vmatprep.subr.mxu0 0.0
      %1900 = vmatpush1.msra.mxu0 0.0
      %1901 = vmatprep.subr.mxu0 0.0
      %1902 = vmatpush1.msra.mxu0 0.0
      %1903 = vmatprep.subr.mxu0 0.0
      %1904 = vmatpush1.msra.mxu0 0.0
      %1905 = vmatprep.subr.mxu0 0.0
      %1906 = vmatpush1.msra.mxu0 0.0
      %1907 = vmatprep.subr.mxu0 0.0
      %1908 = vmatpush1.msra.mxu0 0.0
      %1909 = vmatprep.subr.mxu0 0.0
      %1910 = vmatpush1.msra.mxu0 0.0
      %1911 = vmatprep.subr.mxu0 0.0
      %1912 = vmatpush1.msra.mxu0 0.0
      %1913 = vmatprep.subr.mxu0 0.0
      %1914 = vmatpush1.msra.mxu0 0.0
      %1915 = vmatprep.subr.mxu0 0.0
      %1916 = vmatpush1.msra.mxu0 0.0
      %1917 = vmatprep.subr.mxu0 0.0
      %1918 = vmatpush1.msra.mxu0 0.0
      %1919 = vmatprep.subr.mxu0 0.0
      %1920 = vmatpush1.msra.mxu0 0.0
      %1921 = vmatprep.subr.mxu0 0.0
      %1922 = vmatpush1.msra.mxu0 0.0
      %1923 = vmatprep.subr.mxu0 0.0
      %1924 = vmatpush1.msra.mxu0 0.0
      %1925 = vmatprep.subr.mxu0 0.0
      %1926 = vmatpush1.msra.mxu0 0.0
      %1927 = vmatprep.subr.mxu0 0.0
      %1928 = vmatpush1.msra.mxu0 0.0
      %1929 = vmatprep.subr.mxu0 0.0
      %1930 = vmatpush1.msra.mxu0 0.0
      %1931 = vmatprep.subr.mxu0 0.0
      %1932 = vmatpush1.msra.mxu0 0.0
      %1933 = vmatprep.subr.mxu0 0.0
      %1934 = vmatpush1.msra.mxu0 0.0
      %1935 = vmatprep.subr.mxu0 0.0
      %1936 = vmatpush1.msra.mxu0 0.0
      %1937 = vmatprep.subr.mxu0 0.0
      %1938 = vmatpush1.msra.mxu0 0.0
      %1939 = vmatprep.subr.mxu0 0.0
      %1940 = vmatpush1.msra.mxu0 0.0
      %1941 = vmatprep.subr.mxu0 0.0
      %1942 = vmatpush1.msra.mxu0 0.0
      %1943 = vmatprep.subr.mxu0 0.0
      %1944 = vmatpush1.msra.mxu0 0.0
      %1945 = vmatprep.subr.mxu0 0.0
      %1946 = vmatpush1.msra.mxu0 0.0
      %1947 = vmatprep.subr.mxu0 0.0
      %1948 = vmatpush1.msra.mxu0 0.0
      %1949 = vmatprep.subr.mxu0 0.0
      %1950 = vmatpush1.msra.mxu0 0.0
      %1951 = vmatprep.subr.mxu0 0.0
      %1952 = vmatpush1.msra.mxu0 0.0
      %1953 = vmatprep.subr.mxu0 0.0
      %1954 = vmatpush1.msra.mxu0 0.0
      %1955 = vmatprep.subr.mxu0 0.0
      %1956 = vmatpush1.msra.mxu0 0.0
      %1957 = vmatprep.subr.mxu0 0.0
      %1958 = vmatpush1.msra.mxu0 0.0
      %1959 = vmatprep.subr.mxu0 0.0
      %1960 = vmatpush1.msra.mxu0 0.0
      %1961 = vmatprep.mubr.f32.mxu0 0.0
      %1962 = vmatmul.mubr.f32.gmra.mrb[0].mxu0 %v487
      %v1963 = vpop.f32.mrb[0].mxu0
      %v1964 = vadd.f32 0.0, %v1963
      %v1965 = vpop.f32.mrb[0].mxu0
      %1966 = vdwg.mxu0
      %1967 = vmatprep.subr.mxu0 0.0
      %1968 = vmatpush1.msra.mxu0 %v1683
      %1969 = vmatprep.subr.mxu0 0.0
      %1970 = vmatpush1.msra.mxu0 0.0
      %1971 = vmatprep.subr.mxu0 0.0
      %1972 = vmatpush1.msra.mxu0 0.0
      %1973 = vmatprep.subr.mxu0 0.0
      %1974 = vmatpush1.msra.mxu0 0.0
      %1975 = vmatprep.subr.mxu0 0.0
      %1976 = vmatpush1.msra.mxu0 0.0
      %1977 = vmatprep.subr.mxu0 0.0
      %1978 = vmatpush1.msra.mxu0 0.0
      %1979 = vmatprep.subr.mxu0 0.0
      %1980 = vmatpush1.msra.mxu0 0.0
      %1981 = vmatprep.subr.mxu0 0.0
      %1982 = vmatpush1.msra.mxu0 0.0
      %1983 = vmatprep.subr.mxu0 0.0
      %1984 = vmatpush1.msra.mxu0 0.0
      %1985 = vmatprep.subr.mxu0 0.0
      %1986 = vmatpush1.msra.mxu0 0.0
      %1987 = vmatprep.subr.mxu0 0.0
      %1988 = vmatpush1.msra.mxu0 0.0
      %1989 = vmatprep.subr.mxu0 0.0
      %1990 = vmatpush1.msra.mxu0 0.0
      %1991 = vmatprep.subr.mxu0 0.0
      %1992 = vmatpush1.msra.mxu0 0.0
      %1993 = vmatprep.subr.mxu0 0.0
      %1994 = vmatpush1.msra.mxu0 0.0
      %1995 = vmatprep.subr.mxu0 0.0
      %1996 = vmatpush1.msra.mxu0 0.0
      %1997 = vmatprep.subr.mxu0 0.0
      %1998 = vmatpush1.msra.mxu0 0.0
      %1999 = vmatprep.subr.mxu0 0.0
      %2000 = vmatpush1.msra.mxu0 0.0
      %2001 = vmatprep.subr.mxu0 0.0
      %2002 = vmatpush1.msra.mxu0 0.0
      %2003 = vmatprep.subr.mxu0 0.0
      %2004 = vmatpush1.msra.mxu0 0.0
      %2005 = vmatprep.subr.mxu0 0.0
      %2006 = vmatpush1.msra.mxu0 0.0
      %2007 = vmatprep.subr.mxu0 0.0
      %2008 = vmatpush1.msra.mxu0 0.0
      %2009 = vmatprep.subr.mxu0 0.0
      %2010 = vmatpush1.msra.mxu0 0.0
      %2011 = vmatprep.subr.mxu0 0.0
      %2012 = vmatpush1.msra.mxu0 0.0
      %2013 = vmatprep.subr.mxu0 0.0
      %2014 = vmatpush1.msra.mxu0 0.0
      %2015 = vmatprep.subr.mxu0 0.0
      %2016 = vmatpush1.msra.mxu0 0.0
      %2017 = vmatprep.subr.mxu0 0.0
      %2018 = vmatpush1.msra.mxu0 0.0
      %2019 = vmatprep.subr.mxu0 0.0
      %2020 = vmatpush1.msra.mxu0 0.0
      %2021 = vmatprep.subr.mxu0 0.0
      %2022 = vmatpush1.msra.mxu0 0.0
      %2023 = vmatprep.subr.mxu0 0.0
      %2024 = vmatpush1.msra.mxu0 0.0
      %2025 = vmatprep.subr.mxu0 0.0
      %2026 = vmatpush1.msra.mxu0 0.0
      %2027 = vmatprep.subr.mxu0 0.0
      %2028 = vmatpush1.msra.mxu0 0.0
      %2029 = vmatprep.subr.mxu0 0.0
      %2030 = vmatpush1.msra.mxu0 0.0
      %2031 = vmatprep.mubr.f32.mxu0 0.0
      %2032 = vmatmul.mubr.f32.gmra.mrb[0].mxu0 %v560
      %v2033 = vpop.f32.mrb[0].mxu0
      %v2034 = vadd.f32 0.0, %v2033
      %v2035 = vpop.f32.mrb[0].mxu0
      %2036 = vdwg.mxu0
      %2037 = vmatprep.subr.mxu0 0.0
      %2038 = vmatpush1.msra.mxu0 %v1684
      %2039 = vmatprep.subr.mxu0 0.0
      %2040 = vmatpush1.msra.mxu0 0.0
      %2041 = vmatprep.subr.mxu0 0.0
      %2042 = vmatpush1.msra.mxu0 0.0
      %2043 = vmatprep.subr.mxu0 0.0
      %2044 = vmatpush1.msra.mxu0 0.0
      %2045 = vmatprep.subr.mxu0 0.0
      %2046 = vmatpush1.msra.mxu0 0.0
      %2047 = vmatprep.subr.mxu0 0.0
      %2048 = vmatpush1.msra.mxu0 0.0
      %2049 = vmatprep.subr.mxu0 0.0
      %2050 = vmatpush1.msra.mxu0 0.0
      %2051 = vmatprep.subr.mxu0 0.0
      %2052 = vmatpush1.msra.mxu0 0.0
      %2053 = vmatprep.subr.mxu0 0.0
      %2054 = vmatpush1.msra.mxu0 0.0
      %2055 = vmatprep.subr.mxu0 0.0
      %2056 = vmatpush1.msra.mxu0 0.0
      %2057 = vmatprep.subr.mxu0 0.0
      %2058 = vmatpush1.msra.mxu0 0.0
      %2059 = vmatprep.subr.mxu0 0.0
      %2060 = vmatpush1.msra.mxu0 0.0
      %2061 = vmatprep.subr.mxu0 0.0
      %2062 = vmatpush1.msra.mxu0 0.0
      %2063 = vmatprep.subr.mxu0 0.0
      %2064 = vmatpush1.msra.mxu0 0.0
      %2065 = vmatprep.subr.mxu0 0.0
      %2066 = vmatpush1.msra.mxu0 0.0
      %2067 = vmatprep.subr.mxu0 0.0
      %2068 = vmatpush1.msra.mxu0 0.0
      %2069 = vmatprep.subr.mxu0 0.0
      %2070 = vmatpush1.msra.mxu0 0.0
      %2071 = vmatprep.subr.mxu0 0.0
      %2072 = vmatpush1.msra.mxu0 0.0
      %2073 = vmatprep.subr.mxu0 0.0
      %2074 = vmatpush1.msra.mxu0 0.0
      %2075 = vmatprep.subr.mxu0 0.0
      %2076 = vmatpush1.msra.mxu0 0.0
      %2077 = vmatprep.subr.mxu0 0.0
      %2078 = vmatpush1.msra.mxu0 0.0
      %2079 = vmatprep.subr.mxu0 0.0
      %2080 = vmatpush1.msra.mxu0 0.0
      %2081 = vmatprep.subr.mxu0 0.0
      %2082 = vmatpush1.msra.mxu0 0.0
      %2083 = vmatprep.subr.mxu0 0.0
      %2084 = vmatpush1.msra.mxu0 0.0
      %2085 = vmatprep.subr.mxu0 0.0
      %2086 = vmatpush1.msra.mxu0 0.0
      %2087 = vmatprep.subr.mxu0 0.0
      %2088 = vmatpush1.msra.mxu0 0.0
      %2089 = vmatprep.subr.mxu0 0.0
      %2090 = vmatpush1.msra.mxu0 0.0
      %2091 = vmatprep.subr.mxu0 0.0
      %2092 = vmatpush1.msra.mxu0 0.0
      %2093 = vmatprep.subr.mxu0 0.0
      %2094 = vmatpush1.msra.mxu0 0.0
      %2095 = vmatprep.subr.mxu0 0.0
      %2096 = vmatpush1.msra.mxu0 0.0
      %2097 = vmatprep.subr.mxu0 0.0
      %2098 = vmatpush1.msra.mxu0 0.0
      %2099 = vmatprep.subr.mxu0 0.0
      %2100 = vmatpush1.msra.mxu0 0.0
      %2101 = vmatprep.mubr.f32.mxu0 0.0
      %2102 = vmatmul.mubr.f32.gmra.mrb[0].mxu0 %v633
      %v2103 = vpop.f32.mrb[0].mxu0
      %v2104 = vadd.f32 0.0, %v2103
      %v2105 = vpop.f32.mrb[0].mxu0
      %2106 = vdwg.mxu0
      %2107 = vmatprep.subr.mxu0 0.0
      %2108 = vmatpush1.msra.mxu0 %v1685
      %2109 = vmatprep.subr.mxu0 0.0
      %2110 = vmatpush1.msra.mxu0 0.0
      %2111 = vmatprep.subr.mxu0 0.0
      %2112 = vmatpush1.msra.mxu0 0.0
      %2113 = vmatprep.subr.mxu0 0.0
      %2114 = vmatpush1.msra.mxu0 0.0
      %2115 = vmatprep.subr.mxu0 0.0
      %2116 = vmatpush1.msra.mxu0 0.0
      %2117 = vmatprep.subr.mxu0 0.0
      %2118 = vmatpush1.msra.mxu0 0.0
      %2119 = vmatprep.subr.mxu0 0.0
      %2120 = vmatpush1.msra.mxu0 0.0
      %2121 = vmatprep.subr.mxu0 0.0
      %2122 = vmatpush1.msra.mxu0 0.0
      %2123 = vmatprep.subr.mxu0 0.0
      %2124 = vmatpush1.msra.mxu0 0.0
      %2125 = vmatprep.subr.mxu0 0.0
      %2126 = vmatpush1.msra.mxu0 0.0
      %2127 = vmatprep.subr.mxu0 0.0
      %2128 = vmatpush1.msra.mxu0 0.0
      %2129 = vmatprep.subr.mxu0 0.0
      %2130 = vmatpush1.msra.mxu0 0.0
      %2131 = vmatprep.subr.mxu0 0.0
      %2132 = vmatpush1.msra.mxu0 0.0
      %2133 = vmatprep.subr.mxu0 0.0
      %2134 = vmatpush1.msra.mxu0 0.0
      %2135 = vmatprep.subr.mxu0 0.0
      %2136 = vmatpush1.msra.mxu0 0.0
      %2137 = vmatprep.subr.mxu0 0.0
      %2138 = vmatpush1.msra.mxu0 0.0
      %2139 = vmatprep.subr.mxu0 0.0
      %2140 = vmatpush1.msra.mxu0 0.0
      %2141 = vmatprep.subr.mxu0 0.0
      %2142 = vmatpush1.msra.mxu0 0.0
      %2143 = vmatprep.subr.mxu0 0.0
      %2144 = vmatpush1.msra.mxu0 0.0
      %2145 = vmatprep.subr.mxu0 0.0
      %2146 = vmatpush1.msra.mxu0 0.0
      %2147 = vmatprep.subr.mxu0 0.0
      %2148 = vmatpush1.msra.mxu0 0.0
      %2149 = vmatprep.subr.mxu0 0.0
      %2150 = vmatpush1.msra.mxu0 0.0
      %2151 = vmatprep.subr.mxu0 0.0
      %2152 = vmatpush1.msra.mxu0 0.0
      %2153 = vmatprep.subr.mxu0 0.0
      %2154 = vmatpush1.msra.mxu0 0.0
      %2155 = vmatprep.subr.mxu0 0.0
      %2156 = vmatpush1.msra.mxu0 0.0
      %2157 = vmatprep.subr.mxu0 0.0
      %2158 = vmatpush1.msra.mxu0 0.0
      %2159 = vmatprep.subr.mxu0 0.0
      %2160 = vmatpush1.msra.mxu0 0.0
      %2161 = vmatprep.subr.mxu0 0.0
      %2162 = vmatpush1.msra.mxu0 0.0
      %2163 = vmatprep.subr.mxu0 0.0
      %2164 = vmatpush1.msra.mxu0 0.0
      %2165 = vmatprep.subr.mxu0 0.0
      %2166 = vmatpush1.msra.mxu0 0.0
      %2167 = vmatprep.subr.mxu0 0.0
      %2168 = vmatpush1.msra.mxu0 0.0
      %2169 = vmatprep.subr.mxu0 0.0
      %2170 = vmatpush1.msra.mxu0 0.0
      %2171 = vmatprep.mubr.f32.mxu0 0.0
      %2172 = vmatmul.mubr.f32.gmra.mrb[0].mxu0 %v706
      %v2173 = vpop.f32.mrb[0].mxu0
      %v2174 = vadd.f32 0.0, %v2173
      %v2175 = vpop.f32.mrb[0].mxu0
      %2176 = vdwg.mxu0
      %2177 = vmatprep.subr.mxu0 0.0
      %2178 = vmatpush1.msra.mxu0 %v1686
      %2179 = vmatprep.subr.mxu0 0.0
      %2180 = vmatpush1.msra.mxu0 0.0
      %2181 = vmatprep.subr.mxu0 0.0
      %2182 = vmatpush1.msra.mxu0 0.0
      %2183 = vmatprep.subr.mxu0 0.0
      %2184 = vmatpush1.msra.mxu0 0.0
      %2185 = vmatprep.subr.mxu0 0.0
      %2186 = vmatpush1.msra.mxu0 0.0
      %2187 = vmatprep.subr.mxu0 0.0
      %2188 = vmatpush1.msra.mxu0 0.0
      %2189 = vmatprep.subr.mxu0 0.0
      %2190 = vmatpush1.msra.mxu0 0.0
      %2191 = vmatprep.subr.mxu0 0.0
      %2192 = vmatpush1.msra.mxu0 0.0
      %2193 = vmatprep.subr.mxu0 0.0
      %2194 = vmatpush1.msra.mxu0 0.0
      %2195 = vmatprep.subr.mxu0 0.0
      %2196 = vmatpush1.msra.mxu0 0.0
      %2197 = vmatprep.subr.mxu0 0.0
      %2198 = vmatpush1.msra.mxu0 0.0
      %2199 = vmatprep.subr.mxu0 0.0
      %2200 = vmatpush1.msra.mxu0 0.0
      %2201 = vmatprep.subr.mxu0 0.0
      %2202 = vmatpush1.msra.mxu0 0.0
      %2203 = vmatprep.subr.mxu0 0.0
      %2204 = vmatpush1.msra.mxu0 0.0
      %2205 = vmatprep.subr.mxu0 0.0
      %2206 = vmatpush1.msra.mxu0 0.0
      %2207 = vmatprep.subr.mxu0 0.0
      %2208 = vmatpush1.msra.mxu0 0.0
      %2209 = vmatprep.subr.mxu0 0.0
      %2210 = vmatpush1.msra.mxu0 0.0
      %2211 = vmatprep.subr.mxu0 0.0
      %2212 = vmatpush1.msra.mxu0 0.0
      %2213 = vmatprep.subr.mxu0 0.0
      %2214 = vmatpush1.msra.mxu0 0.0
      %2215 = vmatprep.subr.mxu0 0.0
      %2216 = vmatpush1.msra.mxu0 0.0
      %2217 = vmatprep.subr.mxu0 0.0
      %2218 = vmatpush1.msra.mxu0 0.0
      %2219 = vmatprep.subr.mxu0 0.0
      %2220 = vmatpush1.msra.mxu0 0.0
      %2221 = vmatprep.subr.mxu0 0.0
      %2222 = vmatpush1.msra.mxu0 0.0
      %2223 = vmatprep.subr.mxu0 0.0
      %2224 = vmatpush1.msra.mxu0 0.0
      %2225 = vmatprep.subr.mxu0 0.0
      %2226 = vmatpush1.msra.mxu0 0.0
      %2227 = vmatprep.subr.mxu0 0.0
      %2228 = vmatpush1.msra.mxu0 0.0
      %2229 = vmatprep.subr.mxu0 0.0
      %2230 = vmatpush1.msra.mxu0 0.0
      %2231 = vmatprep.subr.mxu0 0.0
      %2232 = vmatpush1.msra.mxu0 0.0
      %2233 = vmatprep.subr.mxu0 0.0
      %2234 = vmatpush1.msra.mxu0 0.0
      %2235 = vmatprep.subr.mxu0 0.0
      %2236 = vmatpush1.msra.mxu0 0.0
      %2237 = vmatprep.subr.mxu0 0.0
      %2238 = vmatpush1.msra.mxu0 0.0
      %2239 = vmatprep.subr.mxu0 0.0
      %2240 = vmatpush1.msra.mxu0 0.0
      %2241 = vmatprep.mubr.f32.mxu0 0.0
      %2242 = vmatmul.mubr.f32.gmra.mrb[0].mxu0 %v779
      %v2243 = vpop.f32.mrb[0].mxu0
      %v2244 = vadd.f32 0.0, %v2243
      %v2245 = vpop.f32.mrb[0].mxu0
      %2246 = vdwg.mxu0
      %v2247 = vld [vmem:[%s4] sm:$0xf]
      %vm2248 = vcmask 31744
      %v2250 = vsel %vm2248, %v1754, 0
      %v2253 = vsel %vm2248, %v1824, 0
      %v2256 = vsel %vm2248, %v1894, 0
      %v2259 = vsel %vm2248, %v1964, 0
      %v2262 = vsel %vm2248, %v2034, 0
      %v2265 = vsel %vm2248, %v2104, 0
      %v2268 = vsel %vm2248, %v2174, 0
      %v2271 = vsel %vm2248, %v2244, 0
      %vm2273 = vcmask 1043456
      %v2275 = vsel %vm2273, %v2247, 0
      %2277 = vmatprep.subr.mxu0 0.0
      %2278 = vmatpush1.msra.mxu0 %v2275
      %2279 = vmatprep.subr.mxu0 0.0
      %2280 = vmatpush1.msra.mxu0 0.0
      %2281 = vmatprep.subr.mxu0 0.0
      %2282 = vmatpush1.msra.mxu0 0.0
      %2283 = vmatprep.subr.mxu0 0.0
      %2284 = vmatpush1.msra.mxu0 0.0
      %2285 = vmatprep.subr.mxu0 0.0
      %2286 = vmatpush1.msra.mxu0 0.0
      %2287 = vmatprep.subr.mxu0 0.0
      %2288 = vmatpush1.msra.mxu0 0.0
      %2289 = vmatprep.subr.mxu0 0.0
      %2290 = vmatpush1.msra.mxu0 0.0
      %2291 = vmatprep.subr.mxu0 0.0
      %2292 = vmatpush1.msra.mxu0 0.0
      %2293 = vmatprep.subr.mxu0 0.0
      %2294 = vmatpush1.msra.mxu0 0.0
      %2295 = vmatprep.subr.mxu0 0.0
      %2296 = vmatpush1.msra.mxu0 0.0
      %2297 = vmatprep.subr.mxu0 0.0
      %2298 = vmatpush1.msra.mxu0 0.0
      %2299 = vmatprep.subr.mxu0 0.0
      %2300 = vmatpush1.msra.mxu0 0.0
      %2301 = vmatprep.subr.mxu0 0.0
      %2302 = vmatpush1.msra.mxu0 0.0
      %2303 = vmatprep.subr.mxu0 0.0
      %2304 = vmatpush1.msra.mxu0 0.0
      %2305 = vmatprep.subr.mxu0 0.0
      %2306 = vmatpush1.msra.mxu0 0.0
      %2307 = vmatprep.subr.mxu0 0.0
      %2308 = vmatpush1.msra.mxu0 0.0
      %2309 = vmatprep.subr.mxu0 0.0
      %2310 = vmatpush1.msra.mxu0 0.0
      %2311 = vmatprep.subr.mxu0 0.0
      %2312 = vmatpush1.msra.mxu0 0.0
      %2313 = vmatprep.subr.mxu0 0.0
      %2314 = vmatpush1.msra.mxu0 0.0
      %2315 = vmatprep.subr.mxu0 0.0
      %2316 = vmatpush1.msra.mxu0 0.0
      %2317 = vmatprep.subr.mxu0 0.0
      %2318 = vmatpush1.msra.mxu0 0.0
      %2319 = vmatprep.subr.mxu0 0.0
      %2320 = vmatpush1.msra.mxu0 0.0
      %2321 = vmatprep.subr.mxu0 0.0
      %2322 = vmatpush1.msra.mxu0 0.0
      %2323 = vmatprep.subr.mxu0 0.0
      %2324 = vmatpush1.msra.mxu0 0.0
      %2325 = vmatprep.subr.mxu0 0.0
      %2326 = vmatpush1.msra.mxu0 0.0
      %2327 = vmatprep.subr.mxu0 0.0
      %2328 = vmatpush1.msra.mxu0 0.0
      %2329 = vmatprep.subr.mxu0 0.0
      %2330 = vmatpush1.msra.mxu0 0.0
      %2331 = vmatprep.subr.mxu0 0.0
      %2332 = vmatpush1.msra.mxu0 0.0
      %2333 = vmatprep.subr.mxu0 0.0
      %2334 = vmatpush1.msra.mxu0 0.0
      %2335 = vmatprep.subr.mxu0 0.0
      %2336 = vmatpush1.msra.mxu0 0.0
      %2337 = vmatprep.subr.mxu0 0.0
      %2338 = vmatpush1.msra.mxu0 0.0
      %2339 = vmatprep.subr.mxu0 0.0
      %2340 = vmatpush1.msra.mxu0 0.0
      %2341 = vmatprep.mubr.f32.mxu0 0.0
      %2342 = vmatmul.mubr.f32.gmra.mrb[0].mxu0 %v2250
      %v2343 = vpop.f32.mrb[0].mxu0
      %v2344 = vadd.f32 0.0, %v2343
      %v2345 = vpop.f32.mrb[0].mxu0
      %2346 = vmatprep.mubr.f32.mxu0 0.0
      %2347 = vmatmul.mubr.f32.gmra.mrb[0].mxu0 %v2253
      %v2348 = vpop.f32.mrb[0].mxu0
      %v2349 = vadd.f32 0.0, %v2348
      %v2350 = vpop.f32.mrb[0].mxu0
      %2351 = vmatprep.mubr.f32.mxu0 0.0
      %2352 = vmatmul.mubr.f32.gmra.mrb[0].mxu0 %v2256
      %v2353 = vpop.f32.mrb[0].mxu0
      %v2354 = vadd.f32 0.0, %v2353
      %v2355 = vpop.f32.mrb[0].mxu0
      %2356 = vmatprep.mubr.f32.mxu0 0.0
      %2357 = vmatmul.mubr.f32.gmra.mrb[0].mxu0 %v2259
      %v2358 = vpop.f32.mrb[0].mxu0
      %v2359 = vadd.f32 0.0, %v2358
      %v2360 = vpop.f32.mrb[0].mxu0
      %2361 = vmatprep.mubr.f32.mxu0 0.0
      %2362 = vmatmul.mubr.f32.gmra.mrb[0].mxu0 %v2262
      %v2363 = vpop.f32.mrb[0].mxu0
      %v2364 = vadd.f32 0.0, %v2363
      %v2365 = vpop.f32.mrb[0].mxu0
      %2366 = vmatprep.mubr.f32.mxu0 0.0
      %2367 = vmatmul.mubr.f32.gmra.mrb[0].mxu0 %v2265
      %v2368 = vpop.f32.mrb[0].mxu0
      %v2369 = vadd.f32 0.0, %v2368
      %v2370 = vpop.f32.mrb[0].mxu0
      %2371 = vmatprep.mubr.f32.mxu0 0.0
      %2372 = vmatmul.mubr.f32.gmra.mrb[0].mxu0 %v2268
      %v2373 = vpop.f32.mrb[0].mxu0
      %v2374 = vadd.f32 0.0, %v2373
      %v2375 = vpop.f32.mrb[0].mxu0
      %2376 = vmatprep.mubr.f32.mxu0 0.0
      %2377 = vmatmul.mubr.f32.gmra.mrb[0].mxu0 %v2271
      %v2378 = vpop.f32.mrb[0].mxu0
      %v2379 = vadd.f32 0.0, %v2378
      %v2380 = vpop.f32.mrb[0].mxu0
      %2381 = vdwg.mxu0
      %v2382 = vmax.f32 %v2344, 0.0
      %v2383 = vmax.f32 %v2349, 0.0
      %v2384 = vmax.f32 %v2354, 0.0
      %v2385 = vmax.f32 %v2359, 0.0
      %v2386 = vmax.f32 %v2364, 0.0
      %v2387 = vmax.f32 %v2369, 0.0
      %v2388 = vmax.f32 %v2374, 0.0
      %v2389 = vmax.f32 %v2379, 0.0
      %2390 = vst.msk [vmem:[%s248] sm:$0xff] %vm266, %v2382
      %2391 = vst.msk [vmem:[%s248 + $0x8] sm:$0xff] %vm266, %v2383
      %2392 = vst.msk [vmem:[%s248 + $0x10] sm:$0xff] %vm266, %v2384
      %2393 = vst.msk [vmem:[%s248 + $0x18] sm:$0xff] %vm266, %v2385
      %2394 = vst.msk [vmem:[%s248 + $0x20] sm:$0xff] %vm266, %v2386
      %2395 = vst.msk [vmem:[%s248 + $0x28] sm:$0xff] %vm266, %v2387
      %2396 = vst.msk [vmem:[%s248 + $0x30] sm:$0xff] %vm266, %v2388
      %2397 = vst.msk [vmem:[%s248 + $0x38] sm:$0xff] %vm266, %v2389
      %s2398 = smul.u32 8, %s16
      %p2399 = scmp.lt.s32.totalorder %s2398, 15
      %s2400 = scalar_select %p2399, %s2398, 15
      %s2401 = smul.addr %s2400, 8
      %s2402 = scalar_lea.vmem %s5, %s2401
      // Predicated region
      $region41: #{gcn_forward.1} parent=39 // pred_check
        %p2403 = pneg %p149
      $region42: #{gcn_forward.1} parent=39 // pred_check_branch
        %2405 = sbr.rel (%p2403) target = $region44
      $region43: #{gcn_forward.1} parent=39 // pred_region
        %s2406 = smul.u32 8, %s16
      $region44: #{gcn_forward.1} parent=39 // pred_fallthru
        _
    $region40: #{gcn_forward.1} parent=5 // pred_fallthru
      _
    %p2407 = scmp.le.s32.totalorder 2, %s11
    // Predicated region
    $region45: #{gcn_forward.1} parent=5 // pred_check
      %p2408 = pneg %p2407
    $region46: #{gcn_forward.1} parent=5 // pred_check_branch
      %2410 = sbr.rel (%p2408) target = $region48
    $region47: #{gcn_forward.1} parent=5 // pred_region
      %s2411 = ssub.s32 %s11, 2
      // Predicated region
      $region49: #{gcn_forward.1} parent=47 // pred_check
        %p2412 = pneg %p155
      $region50: #{gcn_forward.1} parent=47 // pred_check_branch
        %2414 = sbr.rel (%p2412) target = $region52
      $region51: #{gcn_forward.1} parent=47 // pred_region
        %s2415 = smul.u32 8, %s17
        %p2416 = scmp.lt.s32.totalorder %s2415, 15
        %s2417 = scalar_select %p2416, %s2415, 15
        %s2418 = smul.addr %s2417, 8
        %s2419 = scalar_lea.vmem %s5, %s2418
      $region52: #{gcn_forward.1} parent=47 // pred_fallthru
        _
    $region48: #{gcn_forward.1} parent=5 // pred_fallthru
      _
  $region6: #{gcn_forward.1} parent=0 // loop_footer
    %s15 = sadd.s32 1, %s11
  $region7: #{gcn_forward.1} parent=0 // loop_footer_branch
    %10 = sbr.rel target = $region3
  $region8: #{gcn_forward.1} parent=0 // loop_exit
    _

</llo_original>
